<compile_context>
chip_gen: v6e
topology: v6e:2x2x1
jax: 0.10.0
libtpu: 0.0.40
codegen_flags: <defaults>
</compile_context>

<pallas_src>
import functools

import jax
import jax.numpy as jnp
from jax.experimental import pallas as pl
from jax.experimental.pallas import tpu as pltpu


def _concat_conv2d_kernel(x_ref, w_ref, b_ref, o_ref, *, ksize, w_in):
    """Whole (tiny) batch in a single grid step.

    x_ref: (N, C_in, H*W)   f32, NCHW with spatial flattened onto lanes
    w_ref: (K*K, C_out, C_in)  per-tap weight matrices (time channel removed)
    b_ref: (C_out, 1)       bias with the constant time channel folded in
    o_ref: (N, C_out, H*W)  valid outputs live at h < H-K+1, w < W-K+1
    """
    n_batch, c_in, hw = x_ref.shape
    c_out = o_ref.shape[1]

    for n in range(n_batch):                                   # static, N=2
        x_n = x_ref[n]                                         # (C_in, H*W)
        # Init accumulator with the folded bias (saves a separate add).
        acc = jnp.broadcast_to(b_ref[...], (c_out, hw)).astype(jnp.float32)
        for kh in range(ksize):                                # static 3x3 taps
            for kw in range(ksize):
                tap = kh * ksize + kw
                s = kh * w_in + kw                             # flattened tap offset
                # rolled[p] = x_n[p + s]; for valid output positions p the
                # source index never wraps (p + s <= H*W - 1).
                xr = x_n if s == 0 else pltpu.roll(x_n, shift=hw - s, axis=1)
                # (C_out, C_in) @ (C_in, H*W) -> (C_out, H*W), f32 MXU accumulate.
                acc = acc + jax.lax.dot_general(
                    w_ref[tap], xr,
                    dimension_numbers=(((1,), (0,)), ((), ())),
                    preferred_element_type=jnp.float32,
                )
        o_ref[n] = acc.astype(o_ref.dtype)                     # lane-dense store


def concat_conv2d(t, x_nchw, weight_oihw, bias, *, ksize=3, stride=1, padding=0):
    """Forward pass of ConcatConv2d.

    t:           scalar
    x_nchw:      (N, C_in, H, W)           -- PyTorch NCHW convention
    weight_oihw: (C_out, C_in+1, K, K)     -- PyTorch Conv2d weight layout
    bias:        (C_out,)
    returns:     (N, C_out, H_out, W_out)  -- NCHW, matching PyTorch
    """
    assert stride == 1   # TODO(synk): strided conv not needed for module defaults
    # TODO(synk): padding>0 would need spatial padding + boundary-corrected time fold.
    assert padding == 0
    n, c_in, h, w = x_nchw.shape
    c_out = weight_oihw.shape[0]
    assert weight_oihw.shape == (c_out, c_in + 1, ksize, ksize)
    h_out = h - ksize + 1
    w_out = w - ksize + 1
    hw = h * w

    # Fold the constant time channel into the bias (exact for padding=0, stride=1).
    t_arr = jnp.asarray(t, jnp.float32)
    bias_eff = bias.astype(jnp.float32) + t_arr * jnp.sum(
        weight_oihw[:, 0, :, :].astype(jnp.float32), axis=(1, 2))
    b2d = bias_eff.reshape(c_out, 1)

    # NCHW -> (N, C, H*W): free contiguous reshape (no transpose, no pad, no concat).
    x_flat = x_nchw.reshape(n, c_in, hw).astype(jnp.float32)

    # (C_out, C_in, K, K) -> (K*K, C_out, C_in): per-tap weight matrices.
    w_taps = jnp.transpose(weight_oihw[:, 1:, :, :], (2, 3, 0, 1)).reshape(
        ksize * ksize, c_out, c_in).astype(jnp.float32)

    kernel = functools.partial(_concat_conv2d_kernel, ksize=ksize, w_in=w)

    out_flat = pl.pallas_call(
        kernel,
        out_shape=jax.ShapeDtypeStruct((n, c_out, hw), jnp.float32),
        grid=(1,),                                 # one step: whole batch fits VMEM
        in_specs=[
            pl.BlockSpec((n, c_in, hw), lambda i: (0, 0, 0)),
            pl.BlockSpec((ksize * ksize, c_out, c_in), lambda i: (0, 0, 0)),
            pl.BlockSpec((c_out, 1), lambda i: (0, 0)),
        ],
        out_specs=pl.BlockSpec((n, c_out, hw), lambda i: (0, 0, 0)),
        compiler_params=pltpu.CompilerParams(
            dimension_semantics=("arbitrary",)),
    )(x_flat, w_taps, b2d)

    # (N, C_out, H*W) -> NCHW and keep the valid conv window. Cheap reshape+slice,
    # no transpose needed (output is already channel-major).
    out = out_flat.reshape(n, c_out, h, w)[:, :, :h_out, :w_out]
    return out.astype(x_nchw.dtype)


def _reference(t, x_nchw, weight_oihw, bias, *, padding=0):
    n, c_in, h, w = x_nchw.shape
    tt = jnp.ones((n, 1, h, w), x_nchw.dtype) * jnp.asarray(t, x_nchw.dtype)
    ttx = jnp.concatenate([tt, x_nchw], axis=1)
    out = jax.lax.conv_general_dilated(
        ttx, weight_oihw, window_strides=(1, 1),
        padding=((padding, padding), (padding, padding)),
        dimension_numbers=("NCHW", "OIHW", "NCHW"))
    return out + bias.reshape(1, -1, 1, 1)


if __name__ == "__main__":
    key = jax.random.PRNGKey(0)
    kx, kw_key, kb = jax.random.split(key, 3)

    # Small shapes consistent with the module: batch=2, dim_in=4, spatial=16.
    N, C_IN, H, W = 2, 4, 16, 16
    C_OUT, K = 8, 3
    PAD = 0          # module default padding
    t = 0.5

    x = jax.random.normal(kx, (N, C_IN, H, W), dtype=jnp.float32)

    # Deterministic init mimicking PyTorch Conv2d defaults (kaiming-uniform bound).
    fan_in = (C_IN + 1) * K * K
    bound = 1.0 / jnp.sqrt(jnp.asarray(fan_in, jnp.float32))
    weight = jax.random.uniform(kw_key, (C_OUT, C_IN + 1, K, K),
                                minval=-bound, maxval=bound, dtype=jnp.float32)
    bias = jax.random.uniform(kb, (C_OUT,),
                              minval=-bound, maxval=bound, dtype=jnp.float32)

    out = concat_conv2d(t, x, weight, bias, ksize=K, stride=1, padding=PAD)
    out = jax.block_until_ready(out)

    ref = _reference(t, x, weight, bias, padding=PAD)
    assert out.shape == ref.shape == (N, C_OUT, H - K + 1, W - K + 1)
    assert jnp.allclose(out, ref, atol=1e-4, rtol=1e-4), \
        float(jnp.max(jnp.abs(out - ref)))

    print("KERNEL_OK")
</pallas_src>

<mosaic_0001>
module attributes {stable_mosaic.version = 11 : i64} {
  func.func @_concat_conv2d_kernel(%arg0: i32, %arg1: memref<2x4x256xf32, #tpu.memory_space<vmem>>, %arg2: memref<9x8x4xf32, #tpu.memory_space<vmem>>, %arg3: memref<8x1xf32, #tpu.memory_space<vmem>>, %arg4: memref<2x8x256xf32, #tpu.memory_space<vmem>>) attributes {dimension_semantics = [#tpu.dimension_semantics<arbitrary>], iteration_bounds = array<i64: 1>, scalar_prefetch = 0 : i64, scratch_operands = 0 : i64, tpu.core_type = #tpu.core_type<tc>, window_params = [{pipeline_mode = #tpu.pipeline_mode<synchronous>, transform_indices = @transform_0, window_bounds = array<i64: 2, 4, 256>}, {pipeline_mode = #tpu.pipeline_mode<synchronous>, transform_indices = @transform_1, window_bounds = array<i64: 9, 8, 4>}, {pipeline_mode = #tpu.pipeline_mode<synchronous>, transform_indices = @transform_2, window_bounds = array<i64: 8, 1>}, {pipeline_mode = #tpu.pipeline_mode<synchronous>, transform_indices = @transform_3, window_bounds = array<i64: 2, 8, 256>}]} {
    %c0 = arith.constant 0 : index
    %c0_0 = arith.constant 0 : index
    %c0_1 = arith.constant 0 : index
    %0 = vector.load %arg1[%c0, %c0_0, %c0_1] : memref<2x4x256xf32, #tpu.memory_space<vmem>>, vector<1x4x256xf32>
    %1 = vector.shape_cast %0 : vector<1x4x256xf32> to vector<4x256xf32>
    %c0_2 = arith.constant 0 : index
    %c0_3 = arith.constant 0 : index
    %2 = vector.load %arg3[%c0_2, %c0_3] : memref<8x1xf32, #tpu.memory_space<vmem>>, vector<8x1xf32>
    %3 = vector.shape_cast %2 : vector<8x1xf32> to vector<8x1xf32>
    %4 = vector.broadcast %3 : vector<8x1xf32> to vector<8x256xf32>
    %c0_4 = arith.constant 0 : index
    %c0_5 = arith.constant 0 : index
    %c0_6 = arith.constant 0 : index
    %5 = vector.load %arg2[%c0_4, %c0_5, %c0_6] : memref<9x8x4xf32, #tpu.memory_space<vmem>>, vector<1x8x4xf32>
    %6 = vector.shape_cast %5 : vector<1x8x4xf32> to vector<8x4xf32>
    %cst = arith.constant dense<0.000000e+00> : vector<8x256xf32>
    %7 = tpu.matmul %6, %1, %cst {dimension_numbers = #tpu.dot_dimension_numbers<[1], [0], [0], [1], [0, 0, 1, 1], [], []>} : vector<8x4xf32>, vector<4x256xf32>, vector<8x256xf32> -> vector<8x256xf32>
    %8 = arith.addf %4, %7 : vector<8x256xf32>
    %c255_i32 = arith.constant 255 : i32
    %9 = tpu.dynamic_rotate %1 by %c255_i32 dim 1 : vector<4x256xf32>, i32 -> vector<4x256xf32>
    %c1 = arith.constant 1 : index
    %c0_7 = arith.constant 0 : index
    %c0_8 = arith.constant 0 : index
    %10 = vector.load %arg2[%c1, %c0_7, %c0_8] : memref<9x8x4xf32, #tpu.memory_space<vmem>>, vector<1x8x4xf32>
    %11 = vector.shape_cast %10 : vector<1x8x4xf32> to vector<8x4xf32>
    %cst_9 = arith.constant dense<0.000000e+00> : vector<8x256xf32>
    %12 = tpu.matmul %11, %9, %cst_9 {dimension_numbers = #tpu.dot_dimension_numbers<[1], [0], [0], [1], [0, 0, 1, 1], [], []>} : vector<8x4xf32>, vector<4x256xf32>, vector<8x256xf32> -> vector<8x256xf32>
    %13 = arith.addf %8, %12 : vector<8x256xf32>
    %c254_i32 = arith.constant 254 : i32
    %14 = tpu.dynamic_rotate %1 by %c254_i32 dim 1 : vector<4x256xf32>, i32 -> vector<4x256xf32>
    %c2 = arith.constant 2 : index
    %c0_10 = arith.constant 0 : index
    %c0_11 = arith.constant 0 : index
    %15 = vector.load %arg2[%c2, %c0_10, %c0_11] : memref<9x8x4xf32, #tpu.memory_space<vmem>>, vector<1x8x4xf32>
    %16 = vector.shape_cast %15 : vector<1x8x4xf32> to vector<8x4xf32>
    %cst_12 = arith.constant dense<0.000000e+00> : vector<8x256xf32>
    %17 = tpu.matmul %16, %14, %cst_12 {dimension_numbers = #tpu.dot_dimension_numbers<[1], [0], [0], [1], [0, 0, 1, 1], [], []>} : vector<8x4xf32>, vector<4x256xf32>, vector<8x256xf32> -> vector<8x256xf32>
    %18 = arith.addf %13, %17 : vector<8x256xf32>
    %c240_i32 = arith.constant 240 : i32
    %19 = tpu.dynamic_rotate %1 by %c240_i32 dim 1 : vector<4x256xf32>, i32 -> vector<4x256xf32>
    %c3 = arith.constant 3 : index
    %c0_13 = arith.constant 0 : index
    %c0_14 = arith.constant 0 : index
    %20 = vector.load %arg2[%c3, %c0_13, %c0_14] : memref<9x8x4xf32, #tpu.memory_space<vmem>>, vector<1x8x4xf32>
    %21 = vector.shape_cast %20 : vector<1x8x4xf32> to vector<8x4xf32>
    %cst_15 = arith.constant dense<0.000000e+00> : vector<8x256xf32>
    %22 = tpu.matmul %21, %19, %cst_15 {dimension_numbers = #tpu.dot_dimension_numbers<[1], [0], [0], [1], [0, 0, 1, 1], [], []>} : vector<8x4xf32>, vector<4x256xf32>, vector<8x256xf32> -> vector<8x256xf32>
    %23 = arith.addf %18, %22 : vector<8x256xf32>
    %c239_i32 = arith.constant 239 : i32
    %24 = tpu.dynamic_rotate %1 by %c239_i32 dim 1 : vector<4x256xf32>, i32 -> vector<4x256xf32>
    %c4 = arith.constant 4 : index
    %c0_16 = arith.constant 0 : index
    %c0_17 = arith.constant 0 : index
    %25 = vector.load %arg2[%c4, %c0_16, %c0_17] : memref<9x8x4xf32, #tpu.memory_space<vmem>>, vector<1x8x4xf32>
    %26 = vector.shape_cast %25 : vector<1x8x4xf32> to vector<8x4xf32>
    %cst_18 = arith.constant dense<0.000000e+00> : vector<8x256xf32>
    %27 = tpu.matmul %26, %24, %cst_18 {dimension_numbers = #tpu.dot_dimension_numbers<[1], [0], [0], [1], [0, 0, 1, 1], [], []>} : vector<8x4xf32>, vector<4x256xf32>, vector<8x256xf32> -> vector<8x256xf32>
    %28 = arith.addf %23, %27 : vector<8x256xf32>
    %c238_i32 = arith.constant 238 : i32
    %29 = tpu.dynamic_rotate %1 by %c238_i32 dim 1 : vector<4x256xf32>, i32 -> vector<4x256xf32>
    %c5 = arith.constant 5 : index
    %c0_19 = arith.constant 0 : index
    %c0_20 = arith.constant 0 : index
    %30 = vector.load %arg2[%c5, %c0_19, %c0_20] : memref<9x8x4xf32, #tpu.memory_space<vmem>>, vector<1x8x4xf32>
    %31 = vector.shape_cast %30 : vector<1x8x4xf32> to vector<8x4xf32>
    %cst_21 = arith.constant dense<0.000000e+00> : vector<8x256xf32>
    %32 = tpu.matmul %31, %29, %cst_21 {dimension_numbers = #tpu.dot_dimension_numbers<[1], [0], [0], [1], [0, 0, 1, 1], [], []>} : vector<8x4xf32>, vector<4x256xf32>, vector<8x256xf32> -> vector<8x256xf32>
    %33 = arith.addf %28, %32 : vector<8x256xf32>
    %c224_i32 = arith.constant 224 : i32
    %34 = tpu.dynamic_rotate %1 by %c224_i32 dim 1 : vector<4x256xf32>, i32 -> vector<4x256xf32>
    %c6 = arith.constant 6 : index
    %c0_22 = arith.constant 0 : index
    %c0_23 = arith.constant 0 : index
    %35 = vector.load %arg2[%c6, %c0_22, %c0_23] : memref<9x8x4xf32, #tpu.memory_space<vmem>>, vector<1x8x4xf32>
    %36 = vector.shape_cast %35 : vector<1x8x4xf32> to vector<8x4xf32>
    %cst_24 = arith.constant dense<0.000000e+00> : vector<8x256xf32>
    %37 = tpu.matmul %36, %34, %cst_24 {dimension_numbers = #tpu.dot_dimension_numbers<[1], [0], [0], [1], [0, 0, 1, 1], [], []>} : vector<8x4xf32>, vector<4x256xf32>, vector<8x256xf32> -> vector<8x256xf32>
    %38 = arith.addf %33, %37 : vector<8x256xf32>
    %c223_i32 = arith.constant 223 : i32
    %39 = tpu.dynamic_rotate %1 by %c223_i32 dim 1 : vector<4x256xf32>, i32 -> vector<4x256xf32>
    %c7 = arith.constant 7 : index
    %c0_25 = arith.constant 0 : index
    %c0_26 = arith.constant 0 : index
    %40 = vector.load %arg2[%c7, %c0_25, %c0_26] : memref<9x8x4xf32, #tpu.memory_space<vmem>>, vector<1x8x4xf32>
    %41 = vector.shape_cast %40 : vector<1x8x4xf32> to vector<8x4xf32>
    %cst_27 = arith.constant dense<0.000000e+00> : vector<8x256xf32>
    %42 = tpu.matmul %41, %39, %cst_27 {dimension_numbers = #tpu.dot_dimension_numbers<[1], [0], [0], [1], [0, 0, 1, 1], [], []>} : vector<8x4xf32>, vector<4x256xf32>, vector<8x256xf32> -> vector<8x256xf32>
    %43 = arith.addf %38, %42 : vector<8x256xf32>
    %c222_i32 = arith.constant 222 : i32
    %44 = tpu.dynamic_rotate %1 by %c222_i32 dim 1 : vector<4x256xf32>, i32 -> vector<4x256xf32>
    %c8 = arith.constant 8 : index
    %c0_28 = arith.constant 0 : index
    %c0_29 = arith.constant 0 : index
    %45 = vector.load %arg2[%c8, %c0_28, %c0_29] : memref<9x8x4xf32, #tpu.memory_space<vmem>>, vector<1x8x4xf32>
    %46 = vector.shape_cast %45 : vector<1x8x4xf32> to vector<8x4xf32>
    %cst_30 = arith.constant dense<0.000000e+00> : vector<8x256xf32>
    %47 = tpu.matmul %46, %44, %cst_30 {dimension_numbers = #tpu.dot_dimension_numbers<[1], [0], [0], [1], [0, 0, 1, 1], [], []>} : vector<8x4xf32>, vector<4x256xf32>, vector<8x256xf32> -> vector<8x256xf32>
    %48 = arith.addf %43, %47 : vector<8x256xf32>
    %c0_31 = arith.constant 0 : index
    %c0_32 = arith.constant 0 : index
    %c0_33 = arith.constant 0 : index
    %49 = vector.load %arg4[%c0_31, %c0_32, %c0_33] : memref<2x8x256xf32, #tpu.memory_space<vmem>>, vector<1x8x256xf32>
    %50 = vector.shape_cast %49 : vector<1x8x256xf32> to vector<8x256xf32>
    %51 = vector.shape_cast %48 : vector<8x256xf32> to vector<1x8x256xf32>
    tpu.vector_store %arg4[%c0_31, %c0_32, %c0_33], %51 {strides = array<i32>} : memref<2x8x256xf32, #tpu.memory_space<vmem>>, vector<1x8x256xf32>,
    %c1_34 = arith.constant 1 : index
    %c0_35 = arith.constant 0 : index
    %c0_36 = arith.constant 0 : index
    %52 = vector.load %arg1[%c1_34, %c0_35, %c0_36] : memref<2x4x256xf32, #tpu.memory_space<vmem>>, vector<1x4x256xf32>
    %53 = vector.shape_cast %52 : vector<1x4x256xf32> to vector<4x256xf32>
    %c0_37 = arith.constant 0 : index
    %c0_38 = arith.constant 0 : index
    %54 = vector.load %arg3[%c0_37, %c0_38] : memref<8x1xf32, #tpu.memory_space<vmem>>, vector<8x1xf32>
    %55 = vector.shape_cast %54 : vector<8x1xf32> to vector<8x1xf32>
    %56 = vector.broadcast %55 : vector<8x1xf32> to vector<8x256xf32>
    %c0_39 = arith.constant 0 : index
    %c0_40 = arith.constant 0 : index
    %c0_41 = arith.constant 0 : index
    %57 = vector.load %arg2[%c0_39, %c0_40, %c0_41] : memref<9x8x4xf32, #tpu.memory_space<vmem>>, vector<1x8x4xf32>
    %58 = vector.shape_cast %57 : vector<1x8x4xf32> to vector<8x4xf32>
    %cst_42 = arith.constant dense<0.000000e+00> : vector<8x256xf32>
    %59 = tpu.matmul %58, %53, %cst_42 {dimension_numbers = #tpu.dot_dimension_numbers<[1], [0], [0], [1], [0, 0, 1, 1], [], []>} : vector<8x4xf32>, vector<4x256xf32>, vector<8x256xf32> -> vector<8x256xf32>
    %60 = arith.addf %56, %59 : vector<8x256xf32>
    %c255_i32_43 = arith.constant 255 : i32
    %61 = tpu.dynamic_rotate %53 by %c255_i32_43 dim 1 : vector<4x256xf32>, i32 -> vector<4x256xf32>
    %c1_44 = arith.constant 1 : index
    %c0_45 = arith.constant 0 : index
    %c0_46 = arith.constant 0 : index
    %62 = vector.load %arg2[%c1_44, %c0_45, %c0_46] : memref<9x8x4xf32, #tpu.memory_space<vmem>>, vector<1x8x4xf32>
    %63 = vector.shape_cast %62 : vector<1x8x4xf32> to vector<8x4xf32>
    %cst_47 = arith.constant dense<0.000000e+00> : vector<8x256xf32>
    %64 = tpu.matmul %63, %61, %cst_47 {dimension_numbers = #tpu.dot_dimension_numbers<[1], [0], [0], [1], [0, 0, 1, 1], [], []>} : vector<8x4xf32>, vector<4x256xf32>, vector<8x256xf32> -> vector<8x256xf32>
    %65 = arith.addf %60, %64 : vector<8x256xf32>
    %c254_i32_48 = arith.constant 254 : i32
    %66 = tpu.dynamic_rotate %53 by %c254_i32_48 dim 1 : vector<4x256xf32>, i32 -> vector<4x256xf32>
    %c2_49 = arith.constant 2 : index
    %c0_50 = arith.constant 0 : index
    %c0_51 = arith.constant 0 : index
    %67 = vector.load %arg2[%c2_49, %c0_50, %c0_51] : memref<9x8x4xf32, #tpu.memory_space<vmem>>, vector<1x8x4xf32>
    %68 = vector.shape_cast %67 : vector<1x8x4xf32> to vector<8x4xf32>
    %cst_52 = arith.constant dense<0.000000e+00> : vector<8x256xf32>
    %69 = tpu.matmul %68, %66, %cst_52 {dimension_numbers = #tpu.dot_dimension_numbers<[1], [0], [0], [1], [0, 0, 1, 1], [], []>} : vector<8x4xf32>, vector<4x256xf32>, vector<8x256xf32> -> vector<8x256xf32>
    %70 = arith.addf %65, %69 : vector<8x256xf32>
    %c240_i32_53 = arith.constant 240 : i32
    %71 = tpu.dynamic_rotate %53 by %c240_i32_53 dim 1 : vector<4x256xf32>, i32 -> vector<4x256xf32>
    %c3_54 = arith.constant 3 : index
    %c0_55 = arith.constant 0 : index
    %c0_56 = arith.constant 0 : index
    %72 = vector.load %arg2[%c3_54, %c0_55, %c0_56] : memref<9x8x4xf32, #tpu.memory_space<vmem>>, vector<1x8x4xf32>
    %73 = vector.shape_cast %72 : vector<1x8x4xf32> to vector<8x4xf32>
    %cst_57 = arith.constant dense<0.000000e+00> : vector<8x256xf32>
    %74 = tpu.matmul %73, %71, %cst_57 {dimension_numbers = #tpu.dot_dimension_numbers<[1], [0], [0], [1], [0, 0, 1, 1], [], []>} : vector<8x4xf32>, vector<4x256xf32>, vector<8x256xf32> -> vector<8x256xf32>
    %75 = arith.addf %70, %74 : vector<8x256xf32>
    %c239_i32_58 = arith.constant 239 : i32
    %76 = tpu.dynamic_rotate %53 by %c239_i32_58 dim 1 : vector<4x256xf32>, i32 -> vector<4x256xf32>
    %c4_59 = arith.constant 4 : index
    %c0_60 = arith.constant 0 : index
    %c0_61 = arith.constant 0 : index
    %77 = vector.load %arg2[%c4_59, %c0_60, %c0_61] : memref<9x8x4xf32, #tpu.memory_space<vmem>>, vector<1x8x4xf32>
    %78 = vector.shape_cast %77 : vector<1x8x4xf32> to vector<8x4xf32>
    %cst_62 = arith.constant dense<0.000000e+00> : vector<8x256xf32>
    %79 = tpu.matmul %78, %76, %cst_62 {dimension_numbers = #tpu.dot_dimension_numbers<[1], [0], [0], [1], [0, 0, 1, 1], [], []>} : vector<8x4xf32>, vector<4x256xf32>, vector<8x256xf32> -> vector<8x256xf32>
    %80 = arith.addf %75, %79 : vector<8x256xf32>
    %c238_i32_63 = arith.constant 238 : i32
    %81 = tpu.dynamic_rotate %53 by %c238_i32_63 dim 1 : vector<4x256xf32>, i32 -> vector<4x256xf32>
    %c5_64 = arith.constant 5 : index
    %c0_65 = arith.constant 0 : index
    %c0_66 = arith.constant 0 : index
    %82 = vector.load %arg2[%c5_64, %c0_65, %c0_66] : memref<9x8x4xf32, #tpu.memory_space<vmem>>, vector<1x8x4xf32>
    %83 = vector.shape_cast %82 : vector<1x8x4xf32> to vector<8x4xf32>
    %cst_67 = arith.constant dense<0.000000e+00> : vector<8x256xf32>
    %84 = tpu.matmul %83, %81, %cst_67 {dimension_numbers = #tpu.dot_dimension_numbers<[1], [0], [0], [1], [0, 0, 1, 1], [], []>} : vector<8x4xf32>, vector<4x256xf32>, vector<8x256xf32> -> vector<8x256xf32>
    %85 = arith.addf %80, %84 : vector<8x256xf32>
    %c224_i32_68 = arith.constant 224 : i32
    %86 = tpu.dynamic_rotate %53 by %c224_i32_68 dim 1 : vector<4x256xf32>, i32 -> vector<4x256xf32>
    %c6_69 = arith.constant 6 : index
    %c0_70 = arith.constant 0 : index
    %c0_71 = arith.constant 0 : index
    %87 = vector.load %arg2[%c6_69, %c0_70, %c0_71] : memref<9x8x4xf32, #tpu.memory_space<vmem>>, vector<1x8x4xf32>
    %88 = vector.shape_cast %87 : vector<1x8x4xf32> to vector<8x4xf32>
    %cst_72 = arith.constant dense<0.000000e+00> : vector<8x256xf32>
    %89 = tpu.matmul %88, %86, %cst_72 {dimension_numbers = #tpu.dot_dimension_numbers<[1], [0], [0], [1], [0, 0, 1, 1], [], []>} : vector<8x4xf32>, vector<4x256xf32>, vector<8x256xf32> -> vector<8x256xf32>
    %90 = arith.addf %85, %89 : vector<8x256xf32>
    %c223_i32_73 = arith.constant 223 : i32
    %91 = tpu.dynamic_rotate %53 by %c223_i32_73 dim 1 : vector<4x256xf32>, i32 -> vector<4x256xf32>
    %c7_74 = arith.constant 7 : index
    %c0_75 = arith.constant 0 : index
    %c0_76 = arith.constant 0 : index
    %92 = vector.load %arg2[%c7_74, %c0_75, %c0_76] : memref<9x8x4xf32, #tpu.memory_space<vmem>>, vector<1x8x4xf32>
    %93 = vector.shape_cast %92 : vector<1x8x4xf32> to vector<8x4xf32>
    %cst_77 = arith.constant dense<0.000000e+00> : vector<8x256xf32>
    %94 = tpu.matmul %93, %91, %cst_77 {dimension_numbers = #tpu.dot_dimension_numbers<[1], [0], [0], [1], [0, 0, 1, 1], [], []>} : vector<8x4xf32>, vector<4x256xf32>, vector<8x256xf32> -> vector<8x256xf32>
    %95 = arith.addf %90, %94 : vector<8x256xf32>
    %c222_i32_78 = arith.constant 222 : i32
    %96 = tpu.dynamic_rotate %53 by %c222_i32_78 dim 1 : vector<4x256xf32>, i32 -> vector<4x256xf32>
    %c8_79 = arith.constant 8 : index
    %c0_80 = arith.constant 0 : index
    %c0_81 = arith.constant 0 : index
    %97 = vector.load %arg2[%c8_79, %c0_80, %c0_81] : memref<9x8x4xf32, #tpu.memory_space<vmem>>, vector<1x8x4xf32>
    %98 = vector.shape_cast %97 : vector<1x8x4xf32> to vector<8x4xf32>
    %cst_82 = arith.constant dense<0.000000e+00> : vector<8x256xf32>
    %99 = tpu.matmul %98, %96, %cst_82 {dimension_numbers = #tpu.dot_dimension_numbers<[1], [0], [0], [1], [0, 0, 1, 1], [], []>} : vector<8x4xf32>, vector<4x256xf32>, vector<8x256xf32> -> vector<8x256xf32>
    %100 = arith.addf %95, %99 : vector<8x256xf32>
    %c1_83 = arith.constant 1 : index
    %c0_84 = arith.constant 0 : index
    %c0_85 = arith.constant 0 : index
    %101 = vector.load %arg4[%c1_83, %c0_84, %c0_85] : memref<2x8x256xf32, #tpu.memory_space<vmem>>, vector<1x8x256xf32>
    %102 = vector.shape_cast %101 : vector<1x8x256xf32> to vector<8x256xf32>
    %103 = vector.shape_cast %100 : vector<8x256xf32> to vector<1x8x256xf32>
    tpu.vector_store %arg4[%c1_83, %c0_84, %c0_85], %103 {strides = array<i32>} : memref<2x8x256xf32, #tpu.memory_space<vmem>>, vector<1x8x256xf32>,
    return
  }
  func.func @transform_0(%arg0: i32) -> (i32, i32, i32) {
    %c0_i32 = arith.constant 0 : i32
    %c0_i32_0 = arith.constant 0 : i32
    %c0_i32_1 = arith.constant 0 : i32
    %c0_i32_2 = arith.constant 0 : i32
    return %c0_i32, %c0_i32_0, %c0_i32_1 : i32, i32, i32
  }
  func.func @transform_1(%arg0: i32) -> (i32, i32, i32) {
    %c0_i32 = arith.constant 0 : i32
    %c0_i32_0 = arith.constant 0 : i32
    %c0_i32_1 = arith.constant 0 : i32
    %c0_i32_2 = arith.constant 0 : i32
    return %c0_i32, %c0_i32_0, %c0_i32_1 : i32, i32, i32
  }
  func.func @transform_2(%arg0: i32) -> (i32, i32) {
    %c0_i32 = arith.constant 0 : i32
    %c0_i32_0 = arith.constant 0 : i32
    %c0_i32_1 = arith.constant 0 : i32
    return %c0_i32, %c0_i32_0 : i32, i32
  }
  func.func @transform_3(%arg0: i32) -> (i32, i32, i32) {
    %c0_i32 = arith.constant 0 : i32
    %c0_i32_0 = arith.constant 0 : i32
    %c0_i32_1 = arith.constant 0 : i32
    %c0_i32_2 = arith.constant 0 : i32
    return %c0_i32, %c0_i32_0, %c0_i32_1 : i32, i32, i32
  }
}

</mosaic_0001>

<llo_original>
// kernel: tpu_custom_call.1
$region0: #{tpu_custom_call.1}
  #allocation0 [shape = 'u32[]', space=smem, size = 0x4, offset = 0x4, fixed_abs, tag = 'smem constant byte address 0x4 - core index']
  #allocation1 [shape = 'u32[144,128]{1,0:T(1,128)}', space=vmem, size = 0x12000, scoped, tag = 'internal scratch']
  %s0 = inlined_call_operand.vmem [shape: f32[2,4,256], index: 0, kind: input, shape index: {}]
  %s1 = inlined_call_operand.vmem [shape: f32[9,8,4], index: 1, kind: input, shape index: {}]
  %s2 = inlined_call_operand.vmem [shape: f32[8,1], index: 2, kind: input, shape index: {}]
  %s3 = inlined_call_operand.hbm [shape: f32[2,8,256], index: 3, kind: output, shape index: {}]
  %s4 = sld [smem:[#allocation0]]
  $region22: #{tpu_custom_call.1} parent=0
    _
  %s6 = ssub.s32 1, %s4
  %s7 = scalar_select 0, %s6, %s4
  $region1: #{tpu_custom_call.1} parent=0
    #allocation2 [shape = 'u8[16384]{0}', space=vmem, size = 0x4000, scoped, tag = 'output window, operand 0, single buffered']
    #allocation3 [shape = 's32[1]{0}', space=sflag, size = 0x4, scoped, tag = 'scoped memory for tpu_custom_call.1']
    %8 = vsyncpa [#allocation3], 0
    // Predicated region
    $region2: #{tpu_custom_call.1} parent=1 // pred_check
      _
    $region3: #{tpu_custom_call.1} parent=1 // pred_check_branch
      %10 = sbr.rel (0) target = $region5
    $region4: #{tpu_custom_call.1} parent=1 // pred_region
      _
    $region5: #{tpu_custom_call.1} parent=1 // pred_fallthru
      _
    // Predicated region
    $region6: #{tpu_custom_call.1} parent=1 // pred_check
      _
    $region7: #{tpu_custom_call.1} parent=1 // pred_check_branch
      %12 = sbr.rel (0) target = $region9
    $region8: #{tpu_custom_call.1} parent=1 // pred_region
      _
    $region9: #{tpu_custom_call.1} parent=1 // pred_fallthru
      _
    // Predicated region
    $region10: #{tpu_custom_call.1} parent=1 // pred_check
      _
    $region11: #{tpu_custom_call.1} parent=1 // pred_check_branch
      %14 = sbr.rel (0) target = $region13
    $region12: #{tpu_custom_call.1} parent=1 // pred_region
      _
    $region13: #{tpu_custom_call.1} parent=1 // pred_fallthru
      _
    %v15 = vld [vmem:[%s0] sm:$0xff]
    %v16 = vld [vmem:[%s2] sm:$0xff]
    %18 = vset.pattern.permute.xlu0 0
    %19 = vperm.xlu0 %18, %v16
    %v20 = vpop.permute.xlu0 %19
    %v22 = vld [vmem:[%s1] sm:$0xff]
    %v24 = vcombine.high %v15, %v15
    %vm25 = vcmask 31744
    %v27 = vsel %vm25, %v22, 0
    %vm29 = vcmask 1043456
    %v30 = vsel %vm29, %v15, 0
    %v32 = vsel %vm29, %v24, 0
    %34 = vmatprep.subr.mxu0 0.0
    %35 = vmatpush1.msra.mxu0 0.0
    %36 = vmatprep.subr.mxu0 0.0
    %37 = vmatpush1.msra.mxu0 0.0
    %38 = vmatprep.subr.mxu0 0.0
    %39 = vmatpush1.msra.mxu0 0.0
    %40 = vmatprep.subr.mxu0 0.0
    %41 = vmatpush1.msra.mxu0 0.0
    %42 = vmatprep.subr.mxu0 0.0
    %43 = vmatpush1.msra.mxu0 0.0
    %44 = vmatprep.subr.mxu0 0.0
    %45 = vmatpush1.msra.mxu0 0.0
    %46 = vmatprep.subr.mxu0 0.0
    %47 = vmatpush1.msra.mxu0 0.0
    %48 = vmatprep.subr.mxu0 0.0
    %49 = vmatpush1.msra.mxu0 0.0
    %50 = vmatprep.subr.mxu0 0.0
    %51 = vmatpush1.msra.mxu0 0.0
    %52 = vmatprep.subr.mxu0 0.0
    %53 = vmatpush1.msra.mxu0 0.0
    %54 = vmatprep.subr.mxu0 0.0
    %55 = vmatpush1.msra.mxu0 0.0
    %56 = vmatprep.subr.mxu0 0.0
    %57 = vmatpush1.msra.mxu0 0.0
    %58 = vmatprep.subr.mxu0 0.0
    %59 = vmatpush1.msra.mxu0 0.0
    %60 = vmatprep.subr.mxu0 0.0
    %61 = vmatpush1.msra.mxu0 0.0
    %62 = vmatprep.subr.mxu0 0.0
    %63 = vmatpush1.msra.mxu0 0.0
    %64 = vmatprep.subr.mxu0 %v32
    %65 = vmatpush1.msra.mxu0 %v30
    %66 = vmatprep.subr.mxu0 0.0
    %67 = vmatpush2.msra.mxu0 0.0
    %68 = vmatprep.subr.mxu0 0.0
    %69 = vmatpush2.msra.mxu0 0.0
    %70 = vmatprep.subr.mxu0 0.0
    %71 = vmatpush2.msra.mxu0 0.0
    %72 = vmatprep.subr.mxu0 0.0
    %73 = vmatpush2.msra.mxu0 0.0
    %74 = vmatprep.subr.mxu0 0.0
    %75 = vmatpush2.msra.mxu0 0.0
    %76 = vmatprep.subr.mxu0 0.0
    %77 = vmatpush2.msra.mxu0 0.0
    %78 = vmatprep.subr.mxu0 0.0
    %79 = vmatpush2.msra.mxu0 0.0
    %80 = vmatprep.subr.mxu0 0.0
    %81 = vmatpush2.msra.mxu0 0.0
    %82 = vmatprep.subr.mxu0 0.0
    %83 = vmatpush2.msra.mxu0 0.0
    %84 = vmatprep.subr.mxu0 0.0
    %85 = vmatpush2.msra.mxu0 0.0
    %86 = vmatprep.subr.mxu0 0.0
    %87 = vmatpush2.msra.mxu0 0.0
    %88 = vmatprep.subr.mxu0 0.0
    %89 = vmatpush2.msra.mxu0 0.0
    %90 = vmatprep.subr.mxu0 0.0
    %91 = vmatpush2.msra.mxu0 0.0
    %92 = vmatprep.subr.mxu0 0.0
    %93 = vmatpush2.msra.mxu0 0.0
    %94 = vmatprep.subr.mxu0 0.0
    %95 = vmatpush2.msra.mxu0 0.0
    %96 = vmatprep.subr.mxu0 0.0
    %97 = vmatpush2.msra.mxu0 0.0
    %98 = vmatprep.mubr.f32.mxu0 0.0
    %99 = vmatmul.mubr.f32.gmra.mxu0 %v27
    %v100 = vpop.f32.mrf.mxu0
    %v101 = vadd.f32 0.0, %v100
    %v102 = vpop.f32.mrf.mxu0
    %v103 = vadd.f32 0.0, %v102
    %104 = vdwg.mxu0
    %v105 = vadd.f32 %v20, %v101
    %v106 = vadd.f32 %v20, %v103
    %108 = vrot.lane.b32.xlu0 %v15, 127
    %v109 = vpop.permute.xlu0 %108
    %110 = vrot.lane.b32.xlu0 %v24, 127
    %v111 = vpop.permute.xlu0 %110
    %v112 = vlaneseq
    %v113 = vand.u32 %v112, 127
    %vm114 = vcmp.lt.s32.totalorder %v113, 127
    %v115 = vsel %vm114, %v109, %v111
    %v116 = vsel %vm114, %v111, %v109
    %s117 = scalar_lea.vmem %s1, 8
    %v118 = vld [vmem:[%s117] sm:$0xff]
    %v120 = vsel %vm25, %v118, 0
    %v123 = vsel %vm29, %v115, 0
    %v126 = vsel %vm29, %v116, 0
    %128 = vmatprep.subr.mxu0 0.0
    %129 = vmatpush1.msra.mxu0 0.0
    %130 = vmatprep.subr.mxu0 0.0
    %131 = vmatpush1.msra.mxu0 0.0
    %132 = vmatprep.subr.mxu0 0.0
    %133 = vmatpush1.msra.mxu0 0.0
    %134 = vmatprep.subr.mxu0 0.0
    %135 = vmatpush1.msra.mxu0 0.0
    %136 = vmatprep.subr.mxu0 0.0
    %137 = vmatpush1.msra.mxu0 0.0
    %138 = vmatprep.subr.mxu0 0.0
    %139 = vmatpush1.msra.mxu0 0.0
    %140 = vmatprep.subr.mxu0 0.0
    %141 = vmatpush1.msra.mxu0 0.0
    %142 = vmatprep.subr.mxu0 0.0
    %143 = vmatpush1.msra.mxu0 0.0
    %144 = vmatprep.subr.mxu0 0.0
    %145 = vmatpush1.msra.mxu0 0.0
    %146 = vmatprep.subr.mxu0 0.0
    %147 = vmatpush1.msra.mxu0 0.0
    %148 = vmatprep.subr.mxu0 0.0
    %149 = vmatpush1.msra.mxu0 0.0
    %150 = vmatprep.subr.mxu0 0.0
    %151 = vmatpush1.msra.mxu0 0.0
    %152 = vmatprep.subr.mxu0 0.0
    %153 = vmatpush1.msra.mxu0 0.0
    %154 = vmatprep.subr.mxu0 0.0
    %155 = vmatpush1.msra.mxu0 0.0
    %156 = vmatprep.subr.mxu0 0.0
    %157 = vmatpush1.msra.mxu0 0.0
    %158 = vmatprep.subr.mxu0 %v126
    %159 = vmatpush1.msra.mxu0 %v123
    %160 = vmatprep.subr.mxu0 0.0
    %161 = vmatpush2.msra.mxu0 0.0
    %162 = vmatprep.subr.mxu0 0.0
    %163 = vmatpush2.msra.mxu0 0.0
    %164 = vmatprep.subr.mxu0 0.0
    %165 = vmatpush2.msra.mxu0 0.0
    %166 = vmatprep.subr.mxu0 0.0
    %167 = vmatpush2.msra.mxu0 0.0
    %168 = vmatprep.subr.mxu0 0.0
    %169 = vmatpush2.msra.mxu0 0.0
    %170 = vmatprep.subr.mxu0 0.0
    %171 = vmatpush2.msra.mxu0 0.0
    %172 = vmatprep.subr.mxu0 0.0
    %173 = vmatpush2.msra.mxu0 0.0
    %174 = vmatprep.subr.mxu0 0.0
    %175 = vmatpush2.msra.mxu0 0.0
    %176 = vmatprep.subr.mxu0 0.0
    %177 = vmatpush2.msra.mxu0 0.0
    %178 = vmatprep.subr.mxu0 0.0
    %179 = vmatpush2.msra.mxu0 0.0
    %180 = vmatprep.subr.mxu0 0.0
    %181 = vmatpush2.msra.mxu0 0.0
    %182 = vmatprep.subr.mxu0 0.0
    %183 = vmatpush2.msra.mxu0 0.0
    %184 = vmatprep.subr.mxu0 0.0
    %185 = vmatpush2.msra.mxu0 0.0
    %186 = vmatprep.subr.mxu0 0.0
    %187 = vmatpush2.msra.mxu0 0.0
    %188 = vmatprep.subr.mxu0 0.0
    %189 = vmatpush2.msra.mxu0 0.0
    %190 = vmatprep.subr.mxu0 0.0
    %191 = vmatpush2.msra.mxu0 0.0
    %192 = vmatprep.mubr.f32.mxu0 0.0
    %193 = vmatmul.mubr.f32.gmra.mxu0 %v120
    %v194 = vpop.f32.mrf.mxu0
    %v195 = vadd.f32 0.0, %v194
    %v196 = vpop.f32.mrf.mxu0
    %v197 = vadd.f32 0.0, %v196
    %198 = vdwg.mxu0
    %v199 = vadd.f32 %v105, %v195
    %v200 = vadd.f32 %v106, %v197
    %201 = vrot.lane.b32.xlu0 %v15, 126
    %v202 = vpop.permute.xlu0 %201
    %203 = vrot.lane.b32.xlu0 %v24, 126
    %v204 = vpop.permute.xlu0 %203
    %vm205 = vcmp.lt.s32.totalorder %v113, 126
    %v206 = vsel %vm205, %v202, %v204
    %v207 = vsel %vm205, %v204, %v202
    %s208 = scalar_lea.vmem %s1, 16
    %v209 = vld [vmem:[%s208] sm:$0xff]
    %v211 = vsel %vm25, %v209, 0
    %v214 = vsel %vm29, %v206, 0
    %v217 = vsel %vm29, %v207, 0
    %219 = vmatprep.subr.mxu0 0.0
    %220 = vmatpush1.msra.mxu0 0.0
    %221 = vmatprep.subr.mxu0 0.0
    %222 = vmatpush1.msra.mxu0 0.0
    %223 = vmatprep.subr.mxu0 0.0
    %224 = vmatpush1.msra.mxu0 0.0
    %225 = vmatprep.subr.mxu0 0.0
    %226 = vmatpush1.msra.mxu0 0.0
    %227 = vmatprep.subr.mxu0 0.0
    %228 = vmatpush1.msra.mxu0 0.0
    %229 = vmatprep.subr.mxu0 0.0
    %230 = vmatpush1.msra.mxu0 0.0
    %231 = vmatprep.subr.mxu0 0.0
    %232 = vmatpush1.msra.mxu0 0.0
    %233 = vmatprep.subr.mxu0 0.0
    %234 = vmatpush1.msra.mxu0 0.0
    %235 = vmatprep.subr.mxu0 0.0
    %236 = vmatpush1.msra.mxu0 0.0
    %237 = vmatprep.subr.mxu0 0.0
    %238 = vmatpush1.msra.mxu0 0.0
    %239 = vmatprep.subr.mxu0 0.0
    %240 = vmatpush1.msra.mxu0 0.0
    %241 = vmatprep.subr.mxu0 0.0
    %242 = vmatpush1.msra.mxu0 0.0
    %243 = vmatprep.subr.mxu0 0.0
    %244 = vmatpush1.msra.mxu0 0.0
    %245 = vmatprep.subr.mxu0 0.0
    %246 = vmatpush1.msra.mxu0 0.0
    %247 = vmatprep.subr.mxu0 0.0
    %248 = vmatpush1.msra.mxu0 0.0
    %249 = vmatprep.subr.mxu0 %v217
    %250 = vmatpush1.msra.mxu0 %v214
    %251 = vmatprep.subr.mxu0 0.0
    %252 = vmatpush2.msra.mxu0 0.0
    %253 = vmatprep.subr.mxu0 0.0
    %254 = vmatpush2.msra.mxu0 0.0
    %255 = vmatprep.subr.mxu0 0.0
    %256 = vmatpush2.msra.mxu0 0.0
    %257 = vmatprep.subr.mxu0 0.0
    %258 = vmatpush2.msra.mxu0 0.0
    %259 = vmatprep.subr.mxu0 0.0
    %260 = vmatpush2.msra.mxu0 0.0
    %261 = vmatprep.subr.mxu0 0.0
    %262 = vmatpush2.msra.mxu0 0.0
    %263 = vmatprep.subr.mxu0 0.0
    %264 = vmatpush2.msra.mxu0 0.0
    %265 = vmatprep.subr.mxu0 0.0
    %266 = vmatpush2.msra.mxu0 0.0
    %267 = vmatprep.subr.mxu0 0.0
    %268 = vmatpush2.msra.mxu0 0.0
    %269 = vmatprep.subr.mxu0 0.0
    %270 = vmatpush2.msra.mxu0 0.0
    %271 = vmatprep.subr.mxu0 0.0
    %272 = vmatpush2.msra.mxu0 0.0
    %273 = vmatprep.subr.mxu0 0.0
    %274 = vmatpush2.msra.mxu0 0.0
    %275 = vmatprep.subr.mxu0 0.0
    %276 = vmatpush2.msra.mxu0 0.0
    %277 = vmatprep.subr.mxu0 0.0
    %278 = vmatpush2.msra.mxu0 0.0
    %279 = vmatprep.subr.mxu0 0.0
    %280 = vmatpush2.msra.mxu0 0.0
    %281 = vmatprep.subr.mxu0 0.0
    %282 = vmatpush2.msra.mxu0 0.0
    %283 = vmatprep.mubr.f32.mxu0 0.0
    %284 = vmatmul.mubr.f32.gmra.mxu0 %v211
    %v285 = vpop.f32.mrf.mxu0
    %v286 = vadd.f32 0.0, %v285
    %v287 = vpop.f32.mrf.mxu0
    %v288 = vadd.f32 0.0, %v287
    %289 = vdwg.mxu0
    %v290 = vadd.f32 %v199, %v286
    %v291 = vadd.f32 %v200, %v288
    %292 = vrot.lane.b32.xlu0 %v15, 112
    %v293 = vpop.permute.xlu0 %292
    %294 = vrot.lane.b32.xlu0 %v24, 112
    %v295 = vpop.permute.xlu0 %294
    %vm296 = vcmp.lt.s32.totalorder %v113, 112
    %v297 = vsel %vm296, %v293, %v295
    %v298 = vsel %vm296, %v295, %v293
    %s299 = scalar_lea.vmem %s1, 24
    %v300 = vld [vmem:[%s299] sm:$0xff]
    %v302 = vsel %vm25, %v300, 0
    %v305 = vsel %vm29, %v297, 0
    %v308 = vsel %vm29, %v298, 0
    %310 = vmatprep.subr.mxu0 0.0
    %311 = vmatpush1.msra.mxu0 0.0
    %312 = vmatprep.subr.mxu0 0.0
    %313 = vmatpush1.msra.mxu0 0.0
    %314 = vmatprep.subr.mxu0 0.0
    %315 = vmatpush1.msra.mxu0 0.0
    %316 = vmatprep.subr.mxu0 0.0
    %317 = vmatpush1.msra.mxu0 0.0
    %318 = vmatprep.subr.mxu0 0.0
    %319 = vmatpush1.msra.mxu0 0.0
    %320 = vmatprep.subr.mxu0 0.0
    %321 = vmatpush1.msra.mxu0 0.0
    %322 = vmatprep.subr.mxu0 0.0
    %323 = vmatpush1.msra.mxu0 0.0
    %324 = vmatprep.subr.mxu0 0.0
    %325 = vmatpush1.msra.mxu0 0.0
    %326 = vmatprep.subr.mxu0 0.0
    %327 = vmatpush1.msra.mxu0 0.0
    %328 = vmatprep.subr.mxu0 0.0
    %329 = vmatpush1.msra.mxu0 0.0
    %330 = vmatprep.subr.mxu0 0.0
    %331 = vmatpush1.msra.mxu0 0.0
    %332 = vmatprep.subr.mxu0 0.0
    %333 = vmatpush1.msra.mxu0 0.0
    %334 = vmatprep.subr.mxu0 0.0
    %335 = vmatpush1.msra.mxu0 0.0
    %336 = vmatprep.subr.mxu0 0.0
    %337 = vmatpush1.msra.mxu0 0.0
    %338 = vmatprep.subr.mxu0 0.0
    %339 = vmatpush1.msra.mxu0 0.0
    %340 = vmatprep.subr.mxu0 %v308
    %341 = vmatpush1.msra.mxu0 %v305
    %342 = vmatprep.subr.mxu0 0.0
    %343 = vmatpush2.msra.mxu0 0.0
    %344 = vmatprep.subr.mxu0 0.0
    %345 = vmatpush2.msra.mxu0 0.0
    %346 = vmatprep.subr.mxu0 0.0
    %347 = vmatpush2.msra.mxu0 0.0
    %348 = vmatprep.subr.mxu0 0.0
    %349 = vmatpush2.msra.mxu0 0.0
    %350 = vmatprep.subr.mxu0 0.0
    %351 = vmatpush2.msra.mxu0 0.0
    %352 = vmatprep.subr.mxu0 0.0
    %353 = vmatpush2.msra.mxu0 0.0
    %354 = vmatprep.subr.mxu0 0.0
    %355 = vmatpush2.msra.mxu0 0.0
    %356 = vmatprep.subr.mxu0 0.0
    %357 = vmatpush2.msra.mxu0 0.0
    %358 = vmatprep.subr.mxu0 0.0
    %359 = vmatpush2.msra.mxu0 0.0
    %360 = vmatprep.subr.mxu0 0.0
    %361 = vmatpush2.msra.mxu0 0.0
    %362 = vmatprep.subr.mxu0 0.0
    %363 = vmatpush2.msra.mxu0 0.0
    %364 = vmatprep.subr.mxu0 0.0
    %365 = vmatpush2.msra.mxu0 0.0
    %366 = vmatprep.subr.mxu0 0.0
    %367 = vmatpush2.msra.mxu0 0.0
    %368 = vmatprep.subr.mxu0 0.0
    %369 = vmatpush2.msra.mxu0 0.0
    %370 = vmatprep.subr.mxu0 0.0
    %371 = vmatpush2.msra.mxu0 0.0
    %372 = vmatprep.subr.mxu0 0.0
    %373 = vmatpush2.msra.mxu0 0.0
    %374 = vmatprep.mubr.f32.mxu0 0.0
    %375 = vmatmul.mubr.f32.gmra.mxu0 %v302
    %v376 = vpop.f32.mrf.mxu0
    %v377 = vadd.f32 0.0, %v376
    %v378 = vpop.f32.mrf.mxu0
    %v379 = vadd.f32 0.0, %v378
    %380 = vdwg.mxu0
    %v381 = vadd.f32 %v290, %v377
    %v382 = vadd.f32 %v291, %v379
    %383 = vrot.lane.b32.xlu0 %v15, 111
    %v384 = vpop.permute.xlu0 %383
    %385 = vrot.lane.b32.xlu0 %v24, 111
    %v386 = vpop.permute.xlu0 %385
    %vm387 = vcmp.lt.s32.totalorder %v113, 111
    %v388 = vsel %vm387, %v384, %v386
    %v389 = vsel %vm387, %v386, %v384
    %s390 = scalar_lea.vmem %s1, 32
    %v391 = vld [vmem:[%s390] sm:$0xff]
    %v393 = vsel %vm25, %v391, 0
    %v396 = vsel %vm29, %v388, 0
    %v399 = vsel %vm29, %v389, 0
    %401 = vmatprep.subr.mxu0 0.0
    %402 = vmatpush1.msra.mxu0 0.0
    %403 = vmatprep.subr.mxu0 0.0
    %404 = vmatpush1.msra.mxu0 0.0
    %405 = vmatprep.subr.mxu0 0.0
    %406 = vmatpush1.msra.mxu0 0.0
    %407 = vmatprep.subr.mxu0 0.0
    %408 = vmatpush1.msra.mxu0 0.0
    %409 = vmatprep.subr.mxu0 0.0
    %410 = vmatpush1.msra.mxu0 0.0
    %411 = vmatprep.subr.mxu0 0.0
    %412 = vmatpush1.msra.mxu0 0.0
    %413 = vmatprep.subr.mxu0 0.0
    %414 = vmatpush1.msra.mxu0 0.0
    %415 = vmatprep.subr.mxu0 0.0
    %416 = vmatpush1.msra.mxu0 0.0
    %417 = vmatprep.subr.mxu0 0.0
    %418 = vmatpush1.msra.mxu0 0.0
    %419 = vmatprep.subr.mxu0 0.0
    %420 = vmatpush1.msra.mxu0 0.0
    %421 = vmatprep.subr.mxu0 0.0
    %422 = vmatpush1.msra.mxu0 0.0
    %423 = vmatprep.subr.mxu0 0.0
    %424 = vmatpush1.msra.mxu0 0.0
    %425 = vmatprep.subr.mxu0 0.0
    %426 = vmatpush1.msra.mxu0 0.0
    %427 = vmatprep.subr.mxu0 0.0
    %428 = vmatpush1.msra.mxu0 0.0
    %429 = vmatprep.subr.mxu0 0.0
    %430 = vmatpush1.msra.mxu0 0.0
    %431 = vmatprep.subr.mxu0 %v399
    %432 = vmatpush1.msra.mxu0 %v396
    %433 = vmatprep.subr.mxu0 0.0
    %434 = vmatpush2.msra.mxu0 0.0
    %435 = vmatprep.subr.mxu0 0.0
    %436 = vmatpush2.msra.mxu0 0.0
    %437 = vmatprep.subr.mxu0 0.0
    %438 = vmatpush2.msra.mxu0 0.0
    %439 = vmatprep.subr.mxu0 0.0
    %440 = vmatpush2.msra.mxu0 0.0
    %441 = vmatprep.subr.mxu0 0.0
    %442 = vmatpush2.msra.mxu0 0.0
    %443 = vmatprep.subr.mxu0 0.0
    %444 = vmatpush2.msra.mxu0 0.0
    %445 = vmatprep.subr.mxu0 0.0
    %446 = vmatpush2.msra.mxu0 0.0
    %447 = vmatprep.subr.mxu0 0.0
    %448 = vmatpush2.msra.mxu0 0.0
    %449 = vmatprep.subr.mxu0 0.0
    %450 = vmatpush2.msra.mxu0 0.0
    %451 = vmatprep.subr.mxu0 0.0
    %452 = vmatpush2.msra.mxu0 0.0
    %453 = vmatprep.subr.mxu0 0.0
    %454 = vmatpush2.msra.mxu0 0.0
    %455 = vmatprep.subr.mxu0 0.0
    %456 = vmatpush2.msra.mxu0 0.0
    %457 = vmatprep.subr.mxu0 0.0
    %458 = vmatpush2.msra.mxu0 0.0
    %459 = vmatprep.subr.mxu0 0.0
    %460 = vmatpush2.msra.mxu0 0.0
    %461 = vmatprep.subr.mxu0 0.0
    %462 = vmatpush2.msra.mxu0 0.0
    %463 = vmatprep.subr.mxu0 0.0
    %464 = vmatpush2.msra.mxu0 0.0
    %465 = vmatprep.mubr.f32.mxu0 0.0
    %466 = vmatmul.mubr.f32.gmra.mxu0 %v393
    %v467 = vpop.f32.mrf.mxu0
    %v468 = vadd.f32 0.0, %v467
    %v469 = vpop.f32.mrf.mxu0
    %v470 = vadd.f32 0.0, %v469
    %471 = vdwg.mxu0
    %v472 = vadd.f32 %v381, %v468
    %v473 = vadd.f32 %v382, %v470
    %474 = vrot.lane.b32.xlu0 %v15, 110
    %v475 = vpop.permute.xlu0 %474
    %476 = vrot.lane.b32.xlu0 %v24, 110
    %v477 = vpop.permute.xlu0 %476
    %vm478 = vcmp.lt.s32.totalorder %v113, 110
    %v479 = vsel %vm478, %v475, %v477
    %v480 = vsel %vm478, %v477, %v475
    %s481 = scalar_lea.vmem %s1, 40
    %v482 = vld [vmem:[%s481] sm:$0xff]
    %v484 = vsel %vm25, %v482, 0
    %v487 = vsel %vm29, %v479, 0
    %v490 = vsel %vm29, %v480, 0
    %492 = vmatprep.subr.mxu0 0.0
    %493 = vmatpush1.msra.mxu0 0.0
    %494 = vmatprep.subr.mxu0 0.0
    %495 = vmatpush1.msra.mxu0 0.0
    %496 = vmatprep.subr.mxu0 0.0
    %497 = vmatpush1.msra.mxu0 0.0
    %498 = vmatprep.subr.mxu0 0.0
    %499 = vmatpush1.msra.mxu0 0.0
    %500 = vmatprep.subr.mxu0 0.0
    %501 = vmatpush1.msra.mxu0 0.0
    %502 = vmatprep.subr.mxu0 0.0
    %503 = vmatpush1.msra.mxu0 0.0
    %504 = vmatprep.subr.mxu0 0.0
    %505 = vmatpush1.msra.mxu0 0.0
    %506 = vmatprep.subr.mxu0 0.0
    %507 = vmatpush1.msra.mxu0 0.0
    %508 = vmatprep.subr.mxu0 0.0
    %509 = vmatpush1.msra.mxu0 0.0
    %510 = vmatprep.subr.mxu0 0.0
    %511 = vmatpush1.msra.mxu0 0.0
    %512 = vmatprep.subr.mxu0 0.0
    %513 = vmatpush1.msra.mxu0 0.0
    %514 = vmatprep.subr.mxu0 0.0
    %515 = vmatpush1.msra.mxu0 0.0
    %516 = vmatprep.subr.mxu0 0.0
    %517 = vmatpush1.msra.mxu0 0.0
    %518 = vmatprep.subr.mxu0 0.0
    %519 = vmatpush1.msra.mxu0 0.0
    %520 = vmatprep.subr.mxu0 0.0
    %521 = vmatpush1.msra.mxu0 0.0
    %522 = vmatprep.subr.mxu0 %v490
    %523 = vmatpush1.msra.mxu0 %v487
    %524 = vmatprep.subr.mxu0 0.0
    %525 = vmatpush2.msra.mxu0 0.0
    %526 = vmatprep.subr.mxu0 0.0
    %527 = vmatpush2.msra.mxu0 0.0
    %528 = vmatprep.subr.mxu0 0.0
    %529 = vmatpush2.msra.mxu0 0.0
    %530 = vmatprep.subr.mxu0 0.0
    %531 = vmatpush2.msra.mxu0 0.0
    %532 = vmatprep.subr.mxu0 0.0
    %533 = vmatpush2.msra.mxu0 0.0
    %534 = vmatprep.subr.mxu0 0.0
    %535 = vmatpush2.msra.mxu0 0.0
    %536 = vmatprep.subr.mxu0 0.0
    %537 = vmatpush2.msra.mxu0 0.0
    %538 = vmatprep.subr.mxu0 0.0
    %539 = vmatpush2.msra.mxu0 0.0
    %540 = vmatprep.subr.mxu0 0.0
    %541 = vmatpush2.msra.mxu0 0.0
    %542 = vmatprep.subr.mxu0 0.0
    %543 = vmatpush2.msra.mxu0 0.0
    %544 = vmatprep.subr.mxu0 0.0
    %545 = vmatpush2.msra.mxu0 0.0
    %546 = vmatprep.subr.mxu0 0.0
    %547 = vmatpush2.msra.mxu0 0.0
    %548 = vmatprep.subr.mxu0 0.0
    %549 = vmatpush2.msra.mxu0 0.0
    %550 = vmatprep.subr.mxu0 0.0
    %551 = vmatpush2.msra.mxu0 0.0
    %552 = vmatprep.subr.mxu0 0.0
    %553 = vmatpush2.msra.mxu0 0.0
    %554 = vmatprep.subr.mxu0 0.0
    %555 = vmatpush2.msra.mxu0 0.0
    %556 = vmatprep.mubr.f32.mxu0 0.0
    %557 = vmatmul.mubr.f32.gmra.mxu0 %v484
    %v558 = vpop.f32.mrf.mxu0
    %v559 = vadd.f32 0.0, %v558
    %v560 = vpop.f32.mrf.mxu0
    %v561 = vadd.f32 0.0, %v560
    %562 = vdwg.mxu0
    %v563 = vadd.f32 %v472, %v559
    %v564 = vadd.f32 %v473, %v561
    %565 = vrot.lane.b32.xlu0 %v15, 96
    %v566 = vpop.permute.xlu0 %565
    %567 = vrot.lane.b32.xlu0 %v24, 96
    %v568 = vpop.permute.xlu0 %567
    %vm569 = vcmp.lt.s32.totalorder %v113, 96
    %v570 = vsel %vm569, %v566, %v568
    %v571 = vsel %vm569, %v568, %v566
    %s572 = scalar_lea.vmem %s1, 48
    %v573 = vld [vmem:[%s572] sm:$0xff]
    %v575 = vsel %vm25, %v573, 0
    %v578 = vsel %vm29, %v570, 0
    %v581 = vsel %vm29, %v571, 0
    %583 = vmatprep.subr.mxu0 0.0
    %584 = vmatpush1.msra.mxu0 0.0
    %585 = vmatprep.subr.mxu0 0.0
    %586 = vmatpush1.msra.mxu0 0.0
    %587 = vmatprep.subr.mxu0 0.0
    %588 = vmatpush1.msra.mxu0 0.0
    %589 = vmatprep.subr.mxu0 0.0
    %590 = vmatpush1.msra.mxu0 0.0
    %591 = vmatprep.subr.mxu0 0.0
    %592 = vmatpush1.msra.mxu0 0.0
    %593 = vmatprep.subr.mxu0 0.0
    %594 = vmatpush1.msra.mxu0 0.0
    %595 = vmatprep.subr.mxu0 0.0
    %596 = vmatpush1.msra.mxu0 0.0
    %597 = vmatprep.subr.mxu0 0.0
    %598 = vmatpush1.msra.mxu0 0.0
    %599 = vmatprep.subr.mxu0 0.0
    %600 = vmatpush1.msra.mxu0 0.0
    %601 = vmatprep.subr.mxu0 0.0
    %602 = vmatpush1.msra.mxu0 0.0
    %603 = vmatprep.subr.mxu0 0.0
    %604 = vmatpush1.msra.mxu0 0.0
    %605 = vmatprep.subr.mxu0 0.0
    %606 = vmatpush1.msra.mxu0 0.0
    %607 = vmatprep.subr.mxu0 0.0
    %608 = vmatpush1.msra.mxu0 0.0
    %609 = vmatprep.subr.mxu0 0.0
    %610 = vmatpush1.msra.mxu0 0.0
    %611 = vmatprep.subr.mxu0 0.0
    %612 = vmatpush1.msra.mxu0 0.0
    %613 = vmatprep.subr.mxu0 %v581
    %614 = vmatpush1.msra.mxu0 %v578
    %615 = vmatprep.subr.mxu0 0.0
    %616 = vmatpush2.msra.mxu0 0.0
    %617 = vmatprep.subr.mxu0 0.0
    %618 = vmatpush2.msra.mxu0 0.0
    %619 = vmatprep.subr.mxu0 0.0
    %620 = vmatpush2.msra.mxu0 0.0
    %621 = vmatprep.subr.mxu0 0.0
    %622 = vmatpush2.msra.mxu0 0.0
    %623 = vmatprep.subr.mxu0 0.0
    %624 = vmatpush2.msra.mxu0 0.0
    %625 = vmatprep.subr.mxu0 0.0
    %626 = vmatpush2.msra.mxu0 0.0
    %627 = vmatprep.subr.mxu0 0.0
    %628 = vmatpush2.msra.mxu0 0.0
    %629 = vmatprep.subr.mxu0 0.0
    %630 = vmatpush2.msra.mxu0 0.0
    %631 = vmatprep.subr.mxu0 0.0
    %632 = vmatpush2.msra.mxu0 0.0
    %633 = vmatprep.subr.mxu0 0.0
    %634 = vmatpush2.msra.mxu0 0.0
    %635 = vmatprep.subr.mxu0 0.0
    %636 = vmatpush2.msra.mxu0 0.0
    %637 = vmatprep.subr.mxu0 0.0
    %638 = vmatpush2.msra.mxu0 0.0
    %639 = vmatprep.subr.mxu0 0.0
    %640 = vmatpush2.msra.mxu0 0.0
    %641 = vmatprep.subr.mxu0 0.0
    %642 = vmatpush2.msra.mxu0 0.0
    %643 = vmatprep.subr.mxu0 0.0
    %644 = vmatpush2.msra.mxu0 0.0
    %645 = vmatprep.subr.mxu0 0.0
    %646 = vmatpush2.msra.mxu0 0.0
    %647 = vmatprep.mubr.f32.mxu0 0.0
    %648 = vmatmul.mubr.f32.gmra.mxu0 %v575
    %v649 = vpop.f32.mrf.mxu0
    %v650 = vadd.f32 0.0, %v649
    %v651 = vpop.f32.mrf.mxu0
    %v652 = vadd.f32 0.0, %v651
    %653 = vdwg.mxu0
    %v654 = vadd.f32 %v563, %v650
    %v655 = vadd.f32 %v564, %v652
    %656 = vrot.lane.b32.xlu0 %v15, 95
    %v657 = vpop.permute.xlu0 %656
    %658 = vrot.lane.b32.xlu0 %v24, 95
    %v659 = vpop.permute.xlu0 %658
    %vm660 = vcmp.lt.s32.totalorder %v113, 95
    %v661 = vsel %vm660, %v657, %v659
    %v662 = vsel %vm660, %v659, %v657
    %s663 = scalar_lea.vmem %s1, 56
    %v664 = vld [vmem:[%s663] sm:$0xff]
    %v666 = vsel %vm25, %v664, 0
    %v669 = vsel %vm29, %v661, 0
    %v672 = vsel %vm29, %v662, 0
    %674 = vmatprep.subr.mxu0 0.0
    %675 = vmatpush1.msra.mxu0 0.0
    %676 = vmatprep.subr.mxu0 0.0
    %677 = vmatpush1.msra.mxu0 0.0
    %678 = vmatprep.subr.mxu0 0.0
    %679 = vmatpush1.msra.mxu0 0.0
    %680 = vmatprep.subr.mxu0 0.0
    %681 = vmatpush1.msra.mxu0 0.0
    %682 = vmatprep.subr.mxu0 0.0
    %683 = vmatpush1.msra.mxu0 0.0
    %684 = vmatprep.subr.mxu0 0.0
    %685 = vmatpush1.msra.mxu0 0.0
    %686 = vmatprep.subr.mxu0 0.0
    %687 = vmatpush1.msra.mxu0 0.0
    %688 = vmatprep.subr.mxu0 0.0
    %689 = vmatpush1.msra.mxu0 0.0
    %690 = vmatprep.subr.mxu0 0.0
    %691 = vmatpush1.msra.mxu0 0.0
    %692 = vmatprep.subr.mxu0 0.0
    %693 = vmatpush1.msra.mxu0 0.0
    %694 = vmatprep.subr.mxu0 0.0
    %695 = vmatpush1.msra.mxu0 0.0
    %696 = vmatprep.subr.mxu0 0.0
    %697 = vmatpush1.msra.mxu0 0.0
    %698 = vmatprep.subr.mxu0 0.0
    %699 = vmatpush1.msra.mxu0 0.0
    %700 = vmatprep.subr.mxu0 0.0
    %701 = vmatpush1.msra.mxu0 0.0
    %702 = vmatprep.subr.mxu0 0.0
    %703 = vmatpush1.msra.mxu0 0.0
    %704 = vmatprep.subr.mxu0 %v672
    %705 = vmatpush1.msra.mxu0 %v669
    %706 = vmatprep.subr.mxu0 0.0
    %707 = vmatpush2.msra.mxu0 0.0
    %708 = vmatprep.subr.mxu0 0.0
    %709 = vmatpush2.msra.mxu0 0.0
    %710 = vmatprep.subr.mxu0 0.0
    %711 = vmatpush2.msra.mxu0 0.0
    %712 = vmatprep.subr.mxu0 0.0
    %713 = vmatpush2.msra.mxu0 0.0
    %714 = vmatprep.subr.mxu0 0.0
    %715 = vmatpush2.msra.mxu0 0.0
    %716 = vmatprep.subr.mxu0 0.0
    %717 = vmatpush2.msra.mxu0 0.0
    %718 = vmatprep.subr.mxu0 0.0
    %719 = vmatpush2.msra.mxu0 0.0
    %720 = vmatprep.subr.mxu0 0.0
    %721 = vmatpush2.msra.mxu0 0.0
    %722 = vmatprep.subr.mxu0 0.0
    %723 = vmatpush2.msra.mxu0 0.0
    %724 = vmatprep.subr.mxu0 0.0
    %725 = vmatpush2.msra.mxu0 0.0
    %726 = vmatprep.subr.mxu0 0.0
    %727 = vmatpush2.msra.mxu0 0.0
    %728 = vmatprep.subr.mxu0 0.0
    %729 = vmatpush2.msra.mxu0 0.0
    %730 = vmatprep.subr.mxu0 0.0
    %731 = vmatpush2.msra.mxu0 0.0
    %732 = vmatprep.subr.mxu0 0.0
    %733 = vmatpush2.msra.mxu0 0.0
    %734 = vmatprep.subr.mxu0 0.0
    %735 = vmatpush2.msra.mxu0 0.0
    %736 = vmatprep.subr.mxu0 0.0
    %737 = vmatpush2.msra.mxu0 0.0
    %738 = vmatprep.mubr.f32.mxu0 0.0
    %739 = vmatmul.mubr.f32.gmra.mxu0 %v666
    %v740 = vpop.f32.mrf.mxu0
    %v741 = vadd.f32 0.0, %v740
    %v742 = vpop.f32.mrf.mxu0
    %v743 = vadd.f32 0.0, %v742
    %744 = vdwg.mxu0
    %v745 = vadd.f32 %v654, %v741
    %v746 = vadd.f32 %v655, %v743
    %747 = vrot.lane.b32.xlu0 %v15, 94
    %v748 = vpop.permute.xlu0 %747
    %749 = vrot.lane.b32.xlu0 %v24, 94
    %v750 = vpop.permute.xlu0 %749
    %vm751 = vcmp.lt.s32.totalorder %v113, 94
    %v752 = vsel %vm751, %v748, %v750
    %v753 = vsel %vm751, %v750, %v748
    %s754 = scalar_lea.vmem %s1, 64
    %v755 = vld [vmem:[%s754] sm:$0xff]
    %v757 = vsel %vm25, %v755, 0
    %v760 = vsel %vm29, %v752, 0
    %v763 = vsel %vm29, %v753, 0
    %765 = vmatprep.subr.mxu0 0.0
    %766 = vmatpush1.msra.mxu0 0.0
    %767 = vmatprep.subr.mxu0 0.0
    %768 = vmatpush1.msra.mxu0 0.0
    %769 = vmatprep.subr.mxu0 0.0
    %770 = vmatpush1.msra.mxu0 0.0
    %771 = vmatprep.subr.mxu0 0.0
    %772 = vmatpush1.msra.mxu0 0.0
    %773 = vmatprep.subr.mxu0 0.0
    %774 = vmatpush1.msra.mxu0 0.0
    %775 = vmatprep.subr.mxu0 0.0
    %776 = vmatpush1.msra.mxu0 0.0
    %777 = vmatprep.subr.mxu0 0.0
    %778 = vmatpush1.msra.mxu0 0.0
    %779 = vmatprep.subr.mxu0 0.0
    %780 = vmatpush1.msra.mxu0 0.0
    %781 = vmatprep.subr.mxu0 0.0
    %782 = vmatpush1.msra.mxu0 0.0
    %783 = vmatprep.subr.mxu0 0.0
    %784 = vmatpush1.msra.mxu0 0.0
    %785 = vmatprep.subr.mxu0 0.0
    %786 = vmatpush1.msra.mxu0 0.0
    %787 = vmatprep.subr.mxu0 0.0
    %788 = vmatpush1.msra.mxu0 0.0
    %789 = vmatprep.subr.mxu0 0.0
    %790 = vmatpush1.msra.mxu0 0.0
    %791 = vmatprep.subr.mxu0 0.0
    %792 = vmatpush1.msra.mxu0 0.0
    %793 = vmatprep.subr.mxu0 0.0
    %794 = vmatpush1.msra.mxu0 0.0
    %795 = vmatprep.subr.mxu0 %v763
    %796 = vmatpush1.msra.mxu0 %v760
    %797 = vmatprep.subr.mxu0 0.0
    %798 = vmatpush2.msra.mxu0 0.0
    %799 = vmatprep.subr.mxu0 0.0
    %800 = vmatpush2.msra.mxu0 0.0
    %801 = vmatprep.subr.mxu0 0.0
    %802 = vmatpush2.msra.mxu0 0.0
    %803 = vmatprep.subr.mxu0 0.0
    %804 = vmatpush2.msra.mxu0 0.0
    %805 = vmatprep.subr.mxu0 0.0
    %806 = vmatpush2.msra.mxu0 0.0
    %807 = vmatprep.subr.mxu0 0.0
    %808 = vmatpush2.msra.mxu0 0.0
    %809 = vmatprep.subr.mxu0 0.0
    %810 = vmatpush2.msra.mxu0 0.0
    %811 = vmatprep.subr.mxu0 0.0
    %812 = vmatpush2.msra.mxu0 0.0
    %813 = vmatprep.subr.mxu0 0.0
    %814 = vmatpush2.msra.mxu0 0.0
    %815 = vmatprep.subr.mxu0 0.0
    %816 = vmatpush2.msra.mxu0 0.0
    %817 = vmatprep.subr.mxu0 0.0
    %818 = vmatpush2.msra.mxu0 0.0
    %819 = vmatprep.subr.mxu0 0.0
    %820 = vmatpush2.msra.mxu0 0.0
    %821 = vmatprep.subr.mxu0 0.0
    %822 = vmatpush2.msra.mxu0 0.0
    %823 = vmatprep.subr.mxu0 0.0
    %824 = vmatpush2.msra.mxu0 0.0
    %825 = vmatprep.subr.mxu0 0.0
    %826 = vmatpush2.msra.mxu0 0.0
    %827 = vmatprep.subr.mxu0 0.0
    %828 = vmatpush2.msra.mxu0 0.0
    %829 = vmatprep.mubr.f32.mxu0 0.0
    %830 = vmatmul.mubr.f32.gmra.mxu0 %v757
    %v831 = vpop.f32.mrf.mxu0
    %v832 = vadd.f32 0.0, %v831
    %v833 = vpop.f32.mrf.mxu0
    %v834 = vadd.f32 0.0, %v833
    %835 = vdwg.mxu0
    %v836 = vadd.f32 %v745, %v832
    %v837 = vadd.f32 %v746, %v834
    %838 = vst [vmem:[#allocation2] sm:$0xff] %v836
    %839 = vst [vmem:[#allocation2 + $0x8] sm:$0xff] %v837
    %s840 = scalar_lea.vmem %s0, 8
    %v841 = vld [vmem:[%s840] sm:$0xff]
    %v842 = vld [vmem:[%s2] sm:$0xff]
    %844 = vset.pattern.permute.xlu0 0
    %845 = vperm.xlu0 %844, %v842
    %v846 = vpop.permute.xlu0 %845
    %v848 = vld [vmem:[%s1] sm:$0xff]
    %v850 = vcombine.high %v841, %v841
    %v852 = vsel %vm25, %v848, 0
    %v854 = vsel %vm29, %v841, 0
    %v856 = vsel %vm29, %v850, 0
    %858 = vmatprep.subr.mxu0 0.0
    %859 = vmatpush1.msra.mxu0 0.0
    %860 = vmatprep.subr.mxu0 0.0
    %861 = vmatpush1.msra.mxu0 0.0
    %862 = vmatprep.subr.mxu0 0.0
    %863 = vmatpush1.msra.mxu0 0.0
    %864 = vmatprep.subr.mxu0 0.0
    %865 = vmatpush1.msra.mxu0 0.0
    %866 = vmatprep.subr.mxu0 0.0
    %867 = vmatpush1.msra.mxu0 0.0
    %868 = vmatprep.subr.mxu0 0.0
    %869 = vmatpush1.msra.mxu0 0.0
    %870 = vmatprep.subr.mxu0 0.0
    %871 = vmatpush1.msra.mxu0 0.0
    %872 = vmatprep.subr.mxu0 0.0
    %873 = vmatpush1.msra.mxu0 0.0
    %874 = vmatprep.subr.mxu0 0.0
    %875 = vmatpush1.msra.mxu0 0.0
    %876 = vmatprep.subr.mxu0 0.0
    %877 = vmatpush1.msra.mxu0 0.0
    %878 = vmatprep.subr.mxu0 0.0
    %879 = vmatpush1.msra.mxu0 0.0
    %880 = vmatprep.subr.mxu0 0.0
    %881 = vmatpush1.msra.mxu0 0.0
    %882 = vmatprep.subr.mxu0 0.0
    %883 = vmatpush1.msra.mxu0 0.0
    %884 = vmatprep.subr.mxu0 0.0
    %885 = vmatpush1.msra.mxu0 0.0
    %886 = vmatprep.subr.mxu0 0.0
    %887 = vmatpush1.msra.mxu0 0.0
    %888 = vmatprep.subr.mxu0 %v856
    %889 = vmatpush1.msra.mxu0 %v854
    %890 = vmatprep.subr.mxu0 0.0
    %891 = vmatpush2.msra.mxu0 0.0
    %892 = vmatprep.subr.mxu0 0.0
    %893 = vmatpush2.msra.mxu0 0.0
    %894 = vmatprep.subr.mxu0 0.0
    %895 = vmatpush2.msra.mxu0 0.0
    %896 = vmatprep.subr.mxu0 0.0
    %897 = vmatpush2.msra.mxu0 0.0
    %898 = vmatprep.subr.mxu0 0.0
    %899 = vmatpush2.msra.mxu0 0.0
    %900 = vmatprep.subr.mxu0 0.0
    %901 = vmatpush2.msra.mxu0 0.0
    %902 = vmatprep.subr.mxu0 0.0
    %903 = vmatpush2.msra.mxu0 0.0
    %904 = vmatprep.subr.mxu0 0.0
    %905 = vmatpush2.msra.mxu0 0.0
    %906 = vmatprep.subr.mxu0 0.0
    %907 = vmatpush2.msra.mxu0 0.0
    %908 = vmatprep.subr.mxu0 0.0
    %909 = vmatpush2.msra.mxu0 0.0
    %910 = vmatprep.subr.mxu0 0.0
    %911 = vmatpush2.msra.mxu0 0.0
    %912 = vmatprep.subr.mxu0 0.0
    %913 = vmatpush2.msra.mxu0 0.0
    %914 = vmatprep.subr.mxu0 0.0
    %915 = vmatpush2.msra.mxu0 0.0
    %916 = vmatprep.subr.mxu0 0.0
    %917 = vmatpush2.msra.mxu0 0.0
    %918 = vmatprep.subr.mxu0 0.0
    %919 = vmatpush2.msra.mxu0 0.0
    %920 = vmatprep.subr.mxu0 0.0
    %921 = vmatpush2.msra.mxu0 0.0
    %922 = vmatprep.mubr.f32.mxu0 0.0
    %923 = vmatmul.mubr.f32.gmra.mxu0 %v852
    %v924 = vpop.f32.mrf.mxu0
    %v925 = vadd.f32 0.0, %v924
    %v926 = vpop.f32.mrf.mxu0
    %v927 = vadd.f32 0.0, %v926
    %928 = vdwg.mxu0
    %v929 = vadd.f32 %v846, %v925
    %v930 = vadd.f32 %v846, %v927
    %932 = vrot.lane.b32.xlu0 %v841, 127
    %v933 = vpop.permute.xlu0 %932
    %934 = vrot.lane.b32.xlu0 %v850, 127
    %v935 = vpop.permute.xlu0 %934
    %v936 = vsel %vm114, %v933, %v935
    %v937 = vsel %vm114, %v935, %v933
    %v938 = vld [vmem:[%s117] sm:$0xff]
    %v940 = vsel %vm25, %v938, 0
    %v943 = vsel %vm29, %v936, 0
    %v946 = vsel %vm29, %v937, 0
    %948 = vmatprep.subr.mxu0 0.0
    %949 = vmatpush1.msra.mxu0 0.0
    %950 = vmatprep.subr.mxu0 0.0
    %951 = vmatpush1.msra.mxu0 0.0
    %952 = vmatprep.subr.mxu0 0.0
    %953 = vmatpush1.msra.mxu0 0.0
    %954 = vmatprep.subr.mxu0 0.0
    %955 = vmatpush1.msra.mxu0 0.0
    %956 = vmatprep.subr.mxu0 0.0
    %957 = vmatpush1.msra.mxu0 0.0
    %958 = vmatprep.subr.mxu0 0.0
    %959 = vmatpush1.msra.mxu0 0.0
    %960 = vmatprep.subr.mxu0 0.0
    %961 = vmatpush1.msra.mxu0 0.0
    %962 = vmatprep.subr.mxu0 0.0
    %963 = vmatpush1.msra.mxu0 0.0
    %964 = vmatprep.subr.mxu0 0.0
    %965 = vmatpush1.msra.mxu0 0.0
    %966 = vmatprep.subr.mxu0 0.0
    %967 = vmatpush1.msra.mxu0 0.0
    %968 = vmatprep.subr.mxu0 0.0
    %969 = vmatpush1.msra.mxu0 0.0
    %970 = vmatprep.subr.mxu0 0.0
    %971 = vmatpush1.msra.mxu0 0.0
    %972 = vmatprep.subr.mxu0 0.0
    %973 = vmatpush1.msra.mxu0 0.0
    %974 = vmatprep.subr.mxu0 0.0
    %975 = vmatpush1.msra.mxu0 0.0
    %976 = vmatprep.subr.mxu0 0.0
    %977 = vmatpush1.msra.mxu0 0.0
    %978 = vmatprep.subr.mxu0 %v946
    %979 = vmatpush1.msra.mxu0 %v943
    %980 = vmatprep.subr.mxu0 0.0
    %981 = vmatpush2.msra.mxu0 0.0
    %982 = vmatprep.subr.mxu0 0.0
    %983 = vmatpush2.msra.mxu0 0.0
    %984 = vmatprep.subr.mxu0 0.0
    %985 = vmatpush2.msra.mxu0 0.0
    %986 = vmatprep.subr.mxu0 0.0
    %987 = vmatpush2.msra.mxu0 0.0
    %988 = vmatprep.subr.mxu0 0.0
    %989 = vmatpush2.msra.mxu0 0.0
    %990 = vmatprep.subr.mxu0 0.0
    %991 = vmatpush2.msra.mxu0 0.0
    %992 = vmatprep.subr.mxu0 0.0
    %993 = vmatpush2.msra.mxu0 0.0
    %994 = vmatprep.subr.mxu0 0.0
    %995 = vmatpush2.msra.mxu0 0.0
    %996 = vmatprep.subr.mxu0 0.0
    %997 = vmatpush2.msra.mxu0 0.0
    %998 = vmatprep.subr.mxu0 0.0
    %999 = vmatpush2.msra.mxu0 0.0
    %1000 = vmatprep.subr.mxu0 0.0
    %1001 = vmatpush2.msra.mxu0 0.0
    %1002 = vmatprep.subr.mxu0 0.0
    %1003 = vmatpush2.msra.mxu0 0.0
    %1004 = vmatprep.subr.mxu0 0.0
    %1005 = vmatpush2.msra.mxu0 0.0
    %1006 = vmatprep.subr.mxu0 0.0
    %1007 = vmatpush2.msra.mxu0 0.0
    %1008 = vmatprep.subr.mxu0 0.0
    %1009 = vmatpush2.msra.mxu0 0.0
    %1010 = vmatprep.subr.mxu0 0.0
    %1011 = vmatpush2.msra.mxu0 0.0
    %1012 = vmatprep.mubr.f32.mxu0 0.0
    %1013 = vmatmul.mubr.f32.gmra.mxu0 %v940
    %v1014 = vpop.f32.mrf.mxu0
    %v1015 = vadd.f32 0.0, %v1014
    %v1016 = vpop.f32.mrf.mxu0
    %v1017 = vadd.f32 0.0, %v1016
    %1018 = vdwg.mxu0
    %v1019 = vadd.f32 %v929, %v1015
    %v1020 = vadd.f32 %v930, %v1017
    %1021 = vrot.lane.b32.xlu0 %v841, 126
    %v1022 = vpop.permute.xlu0 %1021
    %1023 = vrot.lane.b32.xlu0 %v850, 126
    %v1024 = vpop.permute.xlu0 %1023
    %v1025 = vsel %vm205, %v1022, %v1024
    %v1026 = vsel %vm205, %v1024, %v1022
    %v1027 = vld [vmem:[%s208] sm:$0xff]
    %v1029 = vsel %vm25, %v1027, 0
    %v1032 = vsel %vm29, %v1025, 0
    %v1035 = vsel %vm29, %v1026, 0
    %1037 = vmatprep.subr.mxu0 0.0
    %1038 = vmatpush1.msra.mxu0 0.0
    %1039 = vmatprep.subr.mxu0 0.0
    %1040 = vmatpush1.msra.mxu0 0.0
    %1041 = vmatprep.subr.mxu0 0.0
    %1042 = vmatpush1.msra.mxu0 0.0
    %1043 = vmatprep.subr.mxu0 0.0
    %1044 = vmatpush1.msra.mxu0 0.0
    %1045 = vmatprep.subr.mxu0 0.0
    %1046 = vmatpush1.msra.mxu0 0.0
    %1047 = vmatprep.subr.mxu0 0.0
    %1048 = vmatpush1.msra.mxu0 0.0
    %1049 = vmatprep.subr.mxu0 0.0
    %1050 = vmatpush1.msra.mxu0 0.0
    %1051 = vmatprep.subr.mxu0 0.0
    %1052 = vmatpush1.msra.mxu0 0.0
    %1053 = vmatprep.subr.mxu0 0.0
    %1054 = vmatpush1.msra.mxu0 0.0
    %1055 = vmatprep.subr.mxu0 0.0
    %1056 = vmatpush1.msra.mxu0 0.0
    %1057 = vmatprep.subr.mxu0 0.0
    %1058 = vmatpush1.msra.mxu0 0.0
    %1059 = vmatprep.subr.mxu0 0.0
    %1060 = vmatpush1.msra.mxu0 0.0
    %1061 = vmatprep.subr.mxu0 0.0
    %1062 = vmatpush1.msra.mxu0 0.0
    %1063 = vmatprep.subr.mxu0 0.0
    %1064 = vmatpush1.msra.mxu0 0.0
    %1065 = vmatprep.subr.mxu0 0.0
    %1066 = vmatpush1.msra.mxu0 0.0
    %1067 = vmatprep.subr.mxu0 %v1035
    %1068 = vmatpush1.msra.mxu0 %v1032
    %1069 = vmatprep.subr.mxu0 0.0
    %1070 = vmatpush2.msra.mxu0 0.0
    %1071 = vmatprep.subr.mxu0 0.0
    %1072 = vmatpush2.msra.mxu0 0.0
    %1073 = vmatprep.subr.mxu0 0.0
    %1074 = vmatpush2.msra.mxu0 0.0
    %1075 = vmatprep.subr.mxu0 0.0
    %1076 = vmatpush2.msra.mxu0 0.0
    %1077 = vmatprep.subr.mxu0 0.0
    %1078 = vmatpush2.msra.mxu0 0.0
    %1079 = vmatprep.subr.mxu0 0.0
    %1080 = vmatpush2.msra.mxu0 0.0
    %1081 = vmatprep.subr.mxu0 0.0
    %1082 = vmatpush2.msra.mxu0 0.0
    %1083 = vmatprep.subr.mxu0 0.0
    %1084 = vmatpush2.msra.mxu0 0.0
    %1085 = vmatprep.subr.mxu0 0.0
    %1086 = vmatpush2.msra.mxu0 0.0
    %1087 = vmatprep.subr.mxu0 0.0
    %1088 = vmatpush2.msra.mxu0 0.0
    %1089 = vmatprep.subr.mxu0 0.0
    %1090 = vmatpush2.msra.mxu0 0.0
    %1091 = vmatprep.subr.mxu0 0.0
    %1092 = vmatpush2.msra.mxu0 0.0
    %1093 = vmatprep.subr.mxu0 0.0
    %1094 = vmatpush2.msra.mxu0 0.0
    %1095 = vmatprep.subr.mxu0 0.0
    %1096 = vmatpush2.msra.mxu0 0.0
    %1097 = vmatprep.subr.mxu0 0.0
    %1098 = vmatpush2.msra.mxu0 0.0
    %1099 = vmatprep.subr.mxu0 0.0
    %1100 = vmatpush2.msra.mxu0 0.0
    %1101 = vmatprep.mubr.f32.mxu0 0.0
    %1102 = vmatmul.mubr.f32.gmra.mxu0 %v1029
    %v1103 = vpop.f32.mrf.mxu0
    %v1104 = vadd.f32 0.0, %v1103
    %v1105 = vpop.f32.mrf.mxu0
    %v1106 = vadd.f32 0.0, %v1105
    %1107 = vdwg.mxu0
    %v1108 = vadd.f32 %v1019, %v1104
    %v1109 = vadd.f32 %v1020, %v1106
    %1110 = vrot.lane.b32.xlu0 %v841, 112
    %v1111 = vpop.permute.xlu0 %1110
    %1112 = vrot.lane.b32.xlu0 %v850, 112
    %v1113 = vpop.permute.xlu0 %1112
    %v1114 = vsel %vm296, %v1111, %v1113
    %v1115 = vsel %vm296, %v1113, %v1111
    %v1116 = vld [vmem:[%s299] sm:$0xff]
    %v1118 = vsel %vm25, %v1116, 0
    %v1121 = vsel %vm29, %v1114, 0
    %v1124 = vsel %vm29, %v1115, 0
    %1126 = vmatprep.subr.mxu0 0.0
    %1127 = vmatpush1.msra.mxu0 0.0
    %1128 = vmatprep.subr.mxu0 0.0
    %1129 = vmatpush1.msra.mxu0 0.0
    %1130 = vmatprep.subr.mxu0 0.0
    %1131 = vmatpush1.msra.mxu0 0.0
    %1132 = vmatprep.subr.mxu0 0.0
    %1133 = vmatpush1.msra.mxu0 0.0
    %1134 = vmatprep.subr.mxu0 0.0
    %1135 = vmatpush1.msra.mxu0 0.0
    %1136 = vmatprep.subr.mxu0 0.0
    %1137 = vmatpush1.msra.mxu0 0.0
    %1138 = vmatprep.subr.mxu0 0.0
    %1139 = vmatpush1.msra.mxu0 0.0
    %1140 = vmatprep.subr.mxu0 0.0
    %1141 = vmatpush1.msra.mxu0 0.0
    %1142 = vmatprep.subr.mxu0 0.0
    %1143 = vmatpush1.msra.mxu0 0.0
    %1144 = vmatprep.subr.mxu0 0.0
    %1145 = vmatpush1.msra.mxu0 0.0
    %1146 = vmatprep.subr.mxu0 0.0
    %1147 = vmatpush1.msra.mxu0 0.0
    %1148 = vmatprep.subr.mxu0 0.0
    %1149 = vmatpush1.msra.mxu0 0.0
    %1150 = vmatprep.subr.mxu0 0.0
    %1151 = vmatpush1.msra.mxu0 0.0
    %1152 = vmatprep.subr.mxu0 0.0
    %1153 = vmatpush1.msra.mxu0 0.0
    %1154 = vmatprep.subr.mxu0 0.0
    %1155 = vmatpush1.msra.mxu0 0.0
    %1156 = vmatprep.subr.mxu0 %v1124
    %1157 = vmatpush1.msra.mxu0 %v1121
    %1158 = vmatprep.subr.mxu0 0.0
    %1159 = vmatpush2.msra.mxu0 0.0
    %1160 = vmatprep.subr.mxu0 0.0
    %1161 = vmatpush2.msra.mxu0 0.0
    %1162 = vmatprep.subr.mxu0 0.0
    %1163 = vmatpush2.msra.mxu0 0.0
    %1164 = vmatprep.subr.mxu0 0.0
    %1165 = vmatpush2.msra.mxu0 0.0
    %1166 = vmatprep.subr.mxu0 0.0
    %1167 = vmatpush2.msra.mxu0 0.0
    %1168 = vmatprep.subr.mxu0 0.0
    %1169 = vmatpush2.msra.mxu0 0.0
    %1170 = vmatprep.subr.mxu0 0.0
    %1171 = vmatpush2.msra.mxu0 0.0
    %1172 = vmatprep.subr.mxu0 0.0
    %1173 = vmatpush2.msra.mxu0 0.0
    %1174 = vmatprep.subr.mxu0 0.0
    %1175 = vmatpush2.msra.mxu0 0.0
    %1176 = vmatprep.subr.mxu0 0.0
    %1177 = vmatpush2.msra.mxu0 0.0
    %1178 = vmatprep.subr.mxu0 0.0
    %1179 = vmatpush2.msra.mxu0 0.0
    %1180 = vmatprep.subr.mxu0 0.0
    %1181 = vmatpush2.msra.mxu0 0.0
    %1182 = vmatprep.subr.mxu0 0.0
    %1183 = vmatpush2.msra.mxu0 0.0
    %1184 = vmatprep.subr.mxu0 0.0
    %1185 = vmatpush2.msra.mxu0 0.0
    %1186 = vmatprep.subr.mxu0 0.0
    %1187 = vmatpush2.msra.mxu0 0.0
    %1188 = vmatprep.subr.mxu0 0.0
    %1189 = vmatpush2.msra.mxu0 0.0
    %1190 = vmatprep.mubr.f32.mxu0 0.0
    %1191 = vmatmul.mubr.f32.gmra.mxu0 %v1118
    %v1192 = vpop.f32.mrf.mxu0
    %v1193 = vadd.f32 0.0, %v1192
    %v1194 = vpop.f32.mrf.mxu0
    %v1195 = vadd.f32 0.0, %v1194
    %1196 = vdwg.mxu0
    %v1197 = vadd.f32 %v1108, %v1193
    %v1198 = vadd.f32 %v1109, %v1195
    %1199 = vrot.lane.b32.xlu0 %v841, 111
    %v1200 = vpop.permute.xlu0 %1199
    %1201 = vrot.lane.b32.xlu0 %v850, 111
    %v1202 = vpop.permute.xlu0 %1201
    %v1203 = vsel %vm387, %v1200, %v1202
    %v1204 = vsel %vm387, %v1202, %v1200
    %v1205 = vld [vmem:[%s390] sm:$0xff]
    %v1207 = vsel %vm25, %v1205, 0
    %v1210 = vsel %vm29, %v1203, 0
    %v1213 = vsel %vm29, %v1204, 0
    %1215 = vmatprep.subr.mxu0 0.0
    %1216 = vmatpush1.msra.mxu0 0.0
    %1217 = vmatprep.subr.mxu0 0.0
    %1218 = vmatpush1.msra.mxu0 0.0
    %1219 = vmatprep.subr.mxu0 0.0
    %1220 = vmatpush1.msra.mxu0 0.0
    %1221 = vmatprep.subr.mxu0 0.0
    %1222 = vmatpush1.msra.mxu0 0.0
    %1223 = vmatprep.subr.mxu0 0.0
    %1224 = vmatpush1.msra.mxu0 0.0
    %1225 = vmatprep.subr.mxu0 0.0
    %1226 = vmatpush1.msra.mxu0 0.0
    %1227 = vmatprep.subr.mxu0 0.0
    %1228 = vmatpush1.msra.mxu0 0.0
    %1229 = vmatprep.subr.mxu0 0.0
    %1230 = vmatpush1.msra.mxu0 0.0
    %1231 = vmatprep.subr.mxu0 0.0
    %1232 = vmatpush1.msra.mxu0 0.0
    %1233 = vmatprep.subr.mxu0 0.0
    %1234 = vmatpush1.msra.mxu0 0.0
    %1235 = vmatprep.subr.mxu0 0.0
    %1236 = vmatpush1.msra.mxu0 0.0
    %1237 = vmatprep.subr.mxu0 0.0
    %1238 = vmatpush1.msra.mxu0 0.0
    %1239 = vmatprep.subr.mxu0 0.0
    %1240 = vmatpush1.msra.mxu0 0.0
    %1241 = vmatprep.subr.mxu0 0.0
    %1242 = vmatpush1.msra.mxu0 0.0
    %1243 = vmatprep.subr.mxu0 0.0
    %1244 = vmatpush1.msra.mxu0 0.0
    %1245 = vmatprep.subr.mxu0 %v1213
    %1246 = vmatpush1.msra.mxu0 %v1210
    %1247 = vmatprep.subr.mxu0 0.0
    %1248 = vmatpush2.msra.mxu0 0.0
    %1249 = vmatprep.subr.mxu0 0.0
    %1250 = vmatpush2.msra.mxu0 0.0
    %1251 = vmatprep.subr.mxu0 0.0
    %1252 = vmatpush2.msra.mxu0 0.0
    %1253 = vmatprep.subr.mxu0 0.0
    %1254 = vmatpush2.msra.mxu0 0.0
    %1255 = vmatprep.subr.mxu0 0.0
    %1256 = vmatpush2.msra.mxu0 0.0
    %1257 = vmatprep.subr.mxu0 0.0
    %1258 = vmatpush2.msra.mxu0 0.0
    %1259 = vmatprep.subr.mxu0 0.0
    %1260 = vmatpush2.msra.mxu0 0.0
    %1261 = vmatprep.subr.mxu0 0.0
    %1262 = vmatpush2.msra.mxu0 0.0
    %1263 = vmatprep.subr.mxu0 0.0
    %1264 = vmatpush2.msra.mxu0 0.0
    %1265 = vmatprep.subr.mxu0 0.0
    %1266 = vmatpush2.msra.mxu0 0.0
    %1267 = vmatprep.subr.mxu0 0.0
    %1268 = vmatpush2.msra.mxu0 0.0
    %1269 = vmatprep.subr.mxu0 0.0
    %1270 = vmatpush2.msra.mxu0 0.0
    %1271 = vmatprep.subr.mxu0 0.0
    %1272 = vmatpush2.msra.mxu0 0.0
    %1273 = vmatprep.subr.mxu0 0.0
    %1274 = vmatpush2.msra.mxu0 0.0
    %1275 = vmatprep.subr.mxu0 0.0
    %1276 = vmatpush2.msra.mxu0 0.0
    %1277 = vmatprep.subr.mxu0 0.0
    %1278 = vmatpush2.msra.mxu0 0.0
    %1279 = vmatprep.mubr.f32.mxu0 0.0
    %1280 = vmatmul.mubr.f32.gmra.mxu0 %v1207
    %v1281 = vpop.f32.mrf.mxu0
    %v1282 = vadd.f32 0.0, %v1281
    %v1283 = vpop.f32.mrf.mxu0
    %v1284 = vadd.f32 0.0, %v1283
    %1285 = vdwg.mxu0
    %v1286 = vadd.f32 %v1197, %v1282
    %v1287 = vadd.f32 %v1198, %v1284
    %1288 = vrot.lane.b32.xlu0 %v841, 110
    %v1289 = vpop.permute.xlu0 %1288
    %1290 = vrot.lane.b32.xlu0 %v850, 110
    %v1291 = vpop.permute.xlu0 %1290
    %v1292 = vsel %vm478, %v1289, %v1291
    %v1293 = vsel %vm478, %v1291, %v1289
    %v1294 = vld [vmem:[%s481] sm:$0xff]
    %v1296 = vsel %vm25, %v1294, 0
    %v1299 = vsel %vm29, %v1292, 0
    %v1302 = vsel %vm29, %v1293, 0
    %1304 = vmatprep.subr.mxu0 0.0
    %1305 = vmatpush1.msra.mxu0 0.0
    %1306 = vmatprep.subr.mxu0 0.0
    %1307 = vmatpush1.msra.mxu0 0.0
    %1308 = vmatprep.subr.mxu0 0.0
    %1309 = vmatpush1.msra.mxu0 0.0
    %1310 = vmatprep.subr.mxu0 0.0
    %1311 = vmatpush1.msra.mxu0 0.0
    %1312 = vmatprep.subr.mxu0 0.0
    %1313 = vmatpush1.msra.mxu0 0.0
    %1314 = vmatprep.subr.mxu0 0.0
    %1315 = vmatpush1.msra.mxu0 0.0
    %1316 = vmatprep.subr.mxu0 0.0
    %1317 = vmatpush1.msra.mxu0 0.0
    %1318 = vmatprep.subr.mxu0 0.0
    %1319 = vmatpush1.msra.mxu0 0.0
    %1320 = vmatprep.subr.mxu0 0.0
    %1321 = vmatpush1.msra.mxu0 0.0
    %1322 = vmatprep.subr.mxu0 0.0
    %1323 = vmatpush1.msra.mxu0 0.0
    %1324 = vmatprep.subr.mxu0 0.0
    %1325 = vmatpush1.msra.mxu0 0.0
    %1326 = vmatprep.subr.mxu0 0.0
    %1327 = vmatpush1.msra.mxu0 0.0
    %1328 = vmatprep.subr.mxu0 0.0
    %1329 = vmatpush1.msra.mxu0 0.0
    %1330 = vmatprep.subr.mxu0 0.0
    %1331 = vmatpush1.msra.mxu0 0.0
    %1332 = vmatprep.subr.mxu0 0.0
    %1333 = vmatpush1.msra.mxu0 0.0
    %1334 = vmatprep.subr.mxu0 %v1302
    %1335 = vmatpush1.msra.mxu0 %v1299
    %1336 = vmatprep.subr.mxu0 0.0
    %1337 = vmatpush2.msra.mxu0 0.0
    %1338 = vmatprep.subr.mxu0 0.0
    %1339 = vmatpush2.msra.mxu0 0.0
    %1340 = vmatprep.subr.mxu0 0.0
    %1341 = vmatpush2.msra.mxu0 0.0
    %1342 = vmatprep.subr.mxu0 0.0
    %1343 = vmatpush2.msra.mxu0 0.0
    %1344 = vmatprep.subr.mxu0 0.0
    %1345 = vmatpush2.msra.mxu0 0.0
    %1346 = vmatprep.subr.mxu0 0.0
    %1347 = vmatpush2.msra.mxu0 0.0
    %1348 = vmatprep.subr.mxu0 0.0
    %1349 = vmatpush2.msra.mxu0 0.0
    %1350 = vmatprep.subr.mxu0 0.0
    %1351 = vmatpush2.msra.mxu0 0.0
    %1352 = vmatprep.subr.mxu0 0.0
    %1353 = vmatpush2.msra.mxu0 0.0
    %1354 = vmatprep.subr.mxu0 0.0
    %1355 = vmatpush2.msra.mxu0 0.0
    %1356 = vmatprep.subr.mxu0 0.0
    %1357 = vmatpush2.msra.mxu0 0.0
    %1358 = vmatprep.subr.mxu0 0.0
    %1359 = vmatpush2.msra.mxu0 0.0
    %1360 = vmatprep.subr.mxu0 0.0
    %1361 = vmatpush2.msra.mxu0 0.0
    %1362 = vmatprep.subr.mxu0 0.0
    %1363 = vmatpush2.msra.mxu0 0.0
    %1364 = vmatprep.subr.mxu0 0.0
    %1365 = vmatpush2.msra.mxu0 0.0
    %1366 = vmatprep.subr.mxu0 0.0
    %1367 = vmatpush2.msra.mxu0 0.0
    %1368 = vmatprep.mubr.f32.mxu0 0.0
    %1369 = vmatmul.mubr.f32.gmra.mxu0 %v1296
    %v1370 = vpop.f32.mrf.mxu0
    %v1371 = vadd.f32 0.0, %v1370
    %v1372 = vpop.f32.mrf.mxu0
    %v1373 = vadd.f32 0.0, %v1372
    %1374 = vdwg.mxu0
    %v1375 = vadd.f32 %v1286, %v1371
    %v1376 = vadd.f32 %v1287, %v1373
    %1377 = vrot.lane.b32.xlu0 %v841, 96
    %v1378 = vpop.permute.xlu0 %1377
    %1379 = vrot.lane.b32.xlu0 %v850, 96
    %v1380 = vpop.permute.xlu0 %1379
    %v1381 = vsel %vm569, %v1378, %v1380
    %v1382 = vsel %vm569, %v1380, %v1378
    %v1383 = vld [vmem:[%s572] sm:$0xff]
    %v1385 = vsel %vm25, %v1383, 0
    %v1388 = vsel %vm29, %v1381, 0
    %v1391 = vsel %vm29, %v1382, 0
    %1393 = vmatprep.subr.mxu0 0.0
    %1394 = vmatpush1.msra.mxu0 0.0
    %1395 = vmatprep.subr.mxu0 0.0
    %1396 = vmatpush1.msra.mxu0 0.0
    %1397 = vmatprep.subr.mxu0 0.0
    %1398 = vmatpush1.msra.mxu0 0.0
    %1399 = vmatprep.subr.mxu0 0.0
    %1400 = vmatpush1.msra.mxu0 0.0
    %1401 = vmatprep.subr.mxu0 0.0
    %1402 = vmatpush1.msra.mxu0 0.0
    %1403 = vmatprep.subr.mxu0 0.0
    %1404 = vmatpush1.msra.mxu0 0.0
    %1405 = vmatprep.subr.mxu0 0.0
    %1406 = vmatpush1.msra.mxu0 0.0
    %1407 = vmatprep.subr.mxu0 0.0
    %1408 = vmatpush1.msra.mxu0 0.0
    %1409 = vmatprep.subr.mxu0 0.0
    %1410 = vmatpush1.msra.mxu0 0.0
    %1411 = vmatprep.subr.mxu0 0.0
    %1412 = vmatpush1.msra.mxu0 0.0
    %1413 = vmatprep.subr.mxu0 0.0
    %1414 = vmatpush1.msra.mxu0 0.0
    %1415 = vmatprep.subr.mxu0 0.0
    %1416 = vmatpush1.msra.mxu0 0.0
    %1417 = vmatprep.subr.mxu0 0.0
    %1418 = vmatpush1.msra.mxu0 0.0
    %1419 = vmatprep.subr.mxu0 0.0
    %1420 = vmatpush1.msra.mxu0 0.0
    %1421 = vmatprep.subr.mxu0 0.0
    %1422 = vmatpush1.msra.mxu0 0.0
    %1423 = vmatprep.subr.mxu0 %v1391
    %1424 = vmatpush1.msra.mxu0 %v1388
    %1425 = vmatprep.subr.mxu0 0.0
    %1426 = vmatpush2.msra.mxu0 0.0
    %1427 = vmatprep.subr.mxu0 0.0
    %1428 = vmatpush2.msra.mxu0 0.0
    %1429 = vmatprep.subr.mxu0 0.0
    %1430 = vmatpush2.msra.mxu0 0.0
    %1431 = vmatprep.subr.mxu0 0.0
    %1432 = vmatpush2.msra.mxu0 0.0
    %1433 = vmatprep.subr.mxu0 0.0
    %1434 = vmatpush2.msra.mxu0 0.0
    %1435 = vmatprep.subr.mxu0 0.0
    %1436 = vmatpush2.msra.mxu0 0.0
    %1437 = vmatprep.subr.mxu0 0.0
    %1438 = vmatpush2.msra.mxu0 0.0
    %1439 = vmatprep.subr.mxu0 0.0
    %1440 = vmatpush2.msra.mxu0 0.0
    %1441 = vmatprep.subr.mxu0 0.0
    %1442 = vmatpush2.msra.mxu0 0.0
    %1443 = vmatprep.subr.mxu0 0.0
    %1444 = vmatpush2.msra.mxu0 0.0
    %1445 = vmatprep.subr.mxu0 0.0
    %1446 = vmatpush2.msra.mxu0 0.0
    %1447 = vmatprep.subr.mxu0 0.0
    %1448 = vmatpush2.msra.mxu0 0.0
    %1449 = vmatprep.subr.mxu0 0.0
    %1450 = vmatpush2.msra.mxu0 0.0
    %1451 = vmatprep.subr.mxu0 0.0
    %1452 = vmatpush2.msra.mxu0 0.0
    %1453 = vmatprep.subr.mxu0 0.0
    %1454 = vmatpush2.msra.mxu0 0.0
    %1455 = vmatprep.subr.mxu0 0.0
    %1456 = vmatpush2.msra.mxu0 0.0
    %1457 = vmatprep.mubr.f32.mxu0 0.0
    %1458 = vmatmul.mubr.f32.gmra.mxu0 %v1385
    %v1459 = vpop.f32.mrf.mxu0
    %v1460 = vadd.f32 0.0, %v1459
    %v1461 = vpop.f32.mrf.mxu0
    %v1462 = vadd.f32 0.0, %v1461
    %1463 = vdwg.mxu0
    %v1464 = vadd.f32 %v1375, %v1460
    %v1465 = vadd.f32 %v1376, %v1462
    %1466 = vrot.lane.b32.xlu0 %v841, 95
    %v1467 = vpop.permute.xlu0 %1466
    %1468 = vrot.lane.b32.xlu0 %v850, 95
    %v1469 = vpop.permute.xlu0 %1468
    %v1470 = vsel %vm660, %v1467, %v1469
    %v1471 = vsel %vm660, %v1469, %v1467
    %v1472 = vld [vmem:[%s663] sm:$0xff]
    %v1474 = vsel %vm25, %v1472, 0
    %v1477 = vsel %vm29, %v1470, 0
    %v1480 = vsel %vm29, %v1471, 0
    %1482 = vmatprep.subr.mxu0 0.0
    %1483 = vmatpush1.msra.mxu0 0.0
    %1484 = vmatprep.subr.mxu0 0.0
    %1485 = vmatpush1.msra.mxu0 0.0
    %1486 = vmatprep.subr.mxu0 0.0
    %1487 = vmatpush1.msra.mxu0 0.0
    %1488 = vmatprep.subr.mxu0 0.0
    %1489 = vmatpush1.msra.mxu0 0.0
    %1490 = vmatprep.subr.mxu0 0.0
    %1491 = vmatpush1.msra.mxu0 0.0
    %1492 = vmatprep.subr.mxu0 0.0
    %1493 = vmatpush1.msra.mxu0 0.0
    %1494 = vmatprep.subr.mxu0 0.0
    %1495 = vmatpush1.msra.mxu0 0.0
    %1496 = vmatprep.subr.mxu0 0.0
    %1497 = vmatpush1.msra.mxu0 0.0
    %1498 = vmatprep.subr.mxu0 0.0
    %1499 = vmatpush1.msra.mxu0 0.0
    %1500 = vmatprep.subr.mxu0 0.0
    %1501 = vmatpush1.msra.mxu0 0.0
    %1502 = vmatprep.subr.mxu0 0.0
    %1503 = vmatpush1.msra.mxu0 0.0
    %1504 = vmatprep.subr.mxu0 0.0
    %1505 = vmatpush1.msra.mxu0 0.0
    %1506 = vmatprep.subr.mxu0 0.0
    %1507 = vmatpush1.msra.mxu0 0.0
    %1508 = vmatprep.subr.mxu0 0.0
    %1509 = vmatpush1.msra.mxu0 0.0
    %1510 = vmatprep.subr.mxu0 0.0
    %1511 = vmatpush1.msra.mxu0 0.0
    %1512 = vmatprep.subr.mxu0 %v1480
    %1513 = vmatpush1.msra.mxu0 %v1477
    %1514 = vmatprep.subr.mxu0 0.0
    %1515 = vmatpush2.msra.mxu0 0.0
    %1516 = vmatprep.subr.mxu0 0.0
    %1517 = vmatpush2.msra.mxu0 0.0
    %1518 = vmatprep.subr.mxu0 0.0
    %1519 = vmatpush2.msra.mxu0 0.0
    %1520 = vmatprep.subr.mxu0 0.0
    %1521 = vmatpush2.msra.mxu0 0.0
    %1522 = vmatprep.subr.mxu0 0.0
    %1523 = vmatpush2.msra.mxu0 0.0
    %1524 = vmatprep.subr.mxu0 0.0
    %1525 = vmatpush2.msra.mxu0 0.0
    %1526 = vmatprep.subr.mxu0 0.0
    %1527 = vmatpush2.msra.mxu0 0.0
    %1528 = vmatprep.subr.mxu0 0.0
    %1529 = vmatpush2.msra.mxu0 0.0
    %1530 = vmatprep.subr.mxu0 0.0
    %1531 = vmatpush2.msra.mxu0 0.0
    %1532 = vmatprep.subr.mxu0 0.0
    %1533 = vmatpush2.msra.mxu0 0.0
    %1534 = vmatprep.subr.mxu0 0.0
    %1535 = vmatpush2.msra.mxu0 0.0
    %1536 = vmatprep.subr.mxu0 0.0
    %1537 = vmatpush2.msra.mxu0 0.0
    %1538 = vmatprep.subr.mxu0 0.0
    %1539 = vmatpush2.msra.mxu0 0.0
    %1540 = vmatprep.subr.mxu0 0.0
    %1541 = vmatpush2.msra.mxu0 0.0
    %1542 = vmatprep.subr.mxu0 0.0
    %1543 = vmatpush2.msra.mxu0 0.0
    %1544 = vmatprep.subr.mxu0 0.0
    %1545 = vmatpush2.msra.mxu0 0.0
    %1546 = vmatprep.mubr.f32.mxu0 0.0
    %1547 = vmatmul.mubr.f32.gmra.mxu0 %v1474
    %v1548 = vpop.f32.mrf.mxu0
    %v1549 = vadd.f32 0.0, %v1548
    %v1550 = vpop.f32.mrf.mxu0
    %v1551 = vadd.f32 0.0, %v1550
    %1552 = vdwg.mxu0
    %v1553 = vadd.f32 %v1464, %v1549
    %v1554 = vadd.f32 %v1465, %v1551
    %1555 = vrot.lane.b32.xlu0 %v841, 94
    %v1556 = vpop.permute.xlu0 %1555
    %1557 = vrot.lane.b32.xlu0 %v850, 94
    %v1558 = vpop.permute.xlu0 %1557
    %v1559 = vsel %vm751, %v1556, %v1558
    %v1560 = vsel %vm751, %v1558, %v1556
    %v1561 = vld [vmem:[%s754] sm:$0xff]
    %v1563 = vsel %vm25, %v1561, 0
    %v1566 = vsel %vm29, %v1559, 0
    %v1569 = vsel %vm29, %v1560, 0
    %1571 = vmatprep.subr.mxu0 0.0
    %1572 = vmatpush1.msra.mxu0 0.0
    %1573 = vmatprep.subr.mxu0 0.0
    %1574 = vmatpush1.msra.mxu0 0.0
    %1575 = vmatprep.subr.mxu0 0.0
    %1576 = vmatpush1.msra.mxu0 0.0
    %1577 = vmatprep.subr.mxu0 0.0
    %1578 = vmatpush1.msra.mxu0 0.0
    %1579 = vmatprep.subr.mxu0 0.0
    %1580 = vmatpush1.msra.mxu0 0.0
    %1581 = vmatprep.subr.mxu0 0.0
    %1582 = vmatpush1.msra.mxu0 0.0
    %1583 = vmatprep.subr.mxu0 0.0
    %1584 = vmatpush1.msra.mxu0 0.0
    %1585 = vmatprep.subr.mxu0 0.0
    %1586 = vmatpush1.msra.mxu0 0.0
    %1587 = vmatprep.subr.mxu0 0.0
    %1588 = vmatpush1.msra.mxu0 0.0
    %1589 = vmatprep.subr.mxu0 0.0
    %1590 = vmatpush1.msra.mxu0 0.0
    %1591 = vmatprep.subr.mxu0 0.0
    %1592 = vmatpush1.msra.mxu0 0.0
    %1593 = vmatprep.subr.mxu0 0.0
    %1594 = vmatpush1.msra.mxu0 0.0
    %1595 = vmatprep.subr.mxu0 0.0
    %1596 = vmatpush1.msra.mxu0 0.0
    %1597 = vmatprep.subr.mxu0 0.0
    %1598 = vmatpush1.msra.mxu0 0.0
    %1599 = vmatprep.subr.mxu0 0.0
    %1600 = vmatpush1.msra.mxu0 0.0
    %1601 = vmatprep.subr.mxu0 %v1569
    %1602 = vmatpush1.msra.mxu0 %v1566
    %1603 = vmatprep.subr.mxu0 0.0
    %1604 = vmatpush2.msra.mxu0 0.0
    %1605 = vmatprep.subr.mxu0 0.0
    %1606 = vmatpush2.msra.mxu0 0.0
    %1607 = vmatprep.subr.mxu0 0.0
    %1608 = vmatpush2.msra.mxu0 0.0
    %1609 = vmatprep.subr.mxu0 0.0
    %1610 = vmatpush2.msra.mxu0 0.0
    %1611 = vmatprep.subr.mxu0 0.0
    %1612 = vmatpush2.msra.mxu0 0.0
    %1613 = vmatprep.subr.mxu0 0.0
    %1614 = vmatpush2.msra.mxu0 0.0
    %1615 = vmatprep.subr.mxu0 0.0
    %1616 = vmatpush2.msra.mxu0 0.0
    %1617 = vmatprep.subr.mxu0 0.0
    %1618 = vmatpush2.msra.mxu0 0.0
    %1619 = vmatprep.subr.mxu0 0.0
    %1620 = vmatpush2.msra.mxu0 0.0
    %1621 = vmatprep.subr.mxu0 0.0
    %1622 = vmatpush2.msra.mxu0 0.0
    %1623 = vmatprep.subr.mxu0 0.0
    %1624 = vmatpush2.msra.mxu0 0.0
    %1625 = vmatprep.subr.mxu0 0.0
    %1626 = vmatpush2.msra.mxu0 0.0
    %1627 = vmatprep.subr.mxu0 0.0
    %1628 = vmatpush2.msra.mxu0 0.0
    %1629 = vmatprep.subr.mxu0 0.0
    %1630 = vmatpush2.msra.mxu0 0.0
    %1631 = vmatprep.subr.mxu0 0.0
    %1632 = vmatpush2.msra.mxu0 0.0
    %1633 = vmatprep.subr.mxu0 0.0
    %1634 = vmatpush2.msra.mxu0 0.0
    %1635 = vmatprep.mubr.f32.mxu0 0.0
    %1636 = vmatmul.mubr.f32.gmra.mxu0 %v1563
    %v1637 = vpop.f32.mrf.mxu0
    %v1638 = vadd.f32 0.0, %v1637
    %v1639 = vpop.f32.mrf.mxu0
    %v1640 = vadd.f32 0.0, %v1639
    %1641 = vdwg.mxu0
    %v1642 = vadd.f32 %v1553, %v1638
    %v1643 = vadd.f32 %v1554, %v1640
    %s1644 = scalar_lea.vmem [#allocation2], 16
    %1645 = vst [vmem:[%s1644] sm:$0xff] %v1642
    %1646 = vst [vmem:[%s1644 + $0x8] sm:$0xff] %v1643
    // Predicated region
    $region14: #{tpu_custom_call.1} parent=1 // pred_check
      _
    $region15: #{tpu_custom_call.1} parent=1 // pred_check_branch
      %1648 = sbr.rel (0) target = $region17
    $region16: #{tpu_custom_call.1} parent=1 // pred_region
      %s1650 = ssub.s32 512, 512
      %1651 = vsyncadd [#allocation3], %s1650
      %s1652 = sshll.u32 [#allocation2], 4
      %s1653 = int_to_ptr.vmem [resolvable:$true] %s1652
      %1658 = dma.vmem_to_hbm [thread:$0]  %s1653, 512, %s3, [#allocation3], 256, 256, 16
    $region17: #{tpu_custom_call.1} parent=1 // pred_fallthru
      _
    // Predicated region
    $region18: #{tpu_custom_call.1} parent=1 // pred_check
      _
    $region19: #{tpu_custom_call.1} parent=1 // pred_check_branch
      %1660 = sbr.rel (0) target = $region21
    $region20: #{tpu_custom_call.1} parent=1 // pred_region
      %1661 = dma.done [#allocation3], 512
    $region21: #{tpu_custom_call.1} parent=1 // pred_fallthru
      _
    %1662 = vsyncpa [#allocation3], 1

</llo_original>
